<compile_context>
chip_gen: v5e
topology: v5e:2x2
jax: 0.10.0
libtpu: 0.0.40
codegen_flags: <defaults>
</compile_context>

<pallas_src>
from functools import partial

import jax
import jax.numpy as jnp
import numpy as np
from jax.experimental import pallas as pl
from jax.experimental.pallas import tpu as pltpu

NUM_DOMAINS = 3
N_CROSS = 3
MLP_DIMS = (64, 32)
DEFAULT_TILE_B = 1024    # batch tile (multiple of 128); 1024-4096 for production batches


def _round_up(x, m):
    return (x + m - 1) // m * m


def dcn_md_kernel(embed_ref, dom_ref,
                  cw_ref, cb_ref,
                  w1_ref, b1_ref, w2_ref, b2_ref,
                  wlr_cn_ref, wlr_mlp_ref, blr_ref,
                  out_ref):
    """One batch tile: embed (TB, D) f32, dom (1, TB) i32 -> out (1, TB) f32."""
    x0 = embed_ref[...]                                     # (TB, D) f32, batch on sublanes

    # ---- CrossNetwork: x_{l+1} = x0 * (x_l @ w_l + b_l) + x_l ----------------
    # (TB, D) @ (D, 1) would use <1% of the MXU; keep it as VPU multiply +
    # lane reduction (XLU), leaving the MXU slot free for the MLP matmuls.
    x = x0
    for l in range(N_CROSS):                                # N_CROSS = 3, unrolled straight-line
        w_l = cw_ref[l, :]                                  # (D,)
        b_l = cb_ref[l, :]                                  # (D,)
        xw = jnp.sum(x * w_l[None, :], axis=-1, keepdims=True)   # (TB, 1) == x @ w_l
        x = x0 * (xw + b_l[None, :]) + x
    cn_out = x                                              # (TB, D)

    # ---- MLP: (Linear -> BN(eval: identity) -> ReLU -> Dropout(identity)) x 2 ----
    # bf16 at the MXU inputs, f32 accumulation; cross / elementwise math stays f32.
    h = jnp.dot(x0.astype(jnp.bfloat16), w1_ref[...].astype(jnp.bfloat16),
                preferred_element_type=jnp.float32) + b1_ref[...]
    h = jnp.maximum(h, 0.0)
    h = jnp.dot(h.astype(jnp.bfloat16), w2_ref[...].astype(jnp.bfloat16),
                preferred_element_type=jnp.float32) + b2_ref[...]
    h = jnp.maximum(h, 0.0)                                 # (TB, H2)

    # ---- LR over cat([cn_out, mlp_out], 1): split dot == cat + Linear; N=1 so VPU+XLU ----
    y = (jnp.sum(cn_out * wlr_cn_ref[...], axis=-1)         # (TB,)
         + jnp.sum(h * wlr_mlp_ref[...], axis=-1)
         + blr_ref[0, 0])                                   # SMEM scalar bias
    sig = pl.reciprocal(1.0 + jnp.exp(-y), approx=True)     # torch.sigmoid(y) on the EUP

    # ---- domain mask selection (all domains share one tower) -----------------
    # zeros_like + where loop over d == 0..NUM_DOMAINS-1 collapses to a single
    # in-range select; padded rows carry dom = -1 and yield 0 (sliced off later).
    dom = dom_ref[...]                                      # (1, TB) int32, lane-dense
    valid = (dom >= 0) & (dom < NUM_DOMAINS)
    out_ref[...] = jnp.where(valid, sig[None, :], 0.0)      # (1, TB) lane-dense store


@partial(jax.jit, static_argnames=("tile_b",))
def dcn_md_forward(embed_x, domain_id,
                   cw, cb, w1, b1, w2, b2, wlr_cn, wlr_mlp, blr,
                   *, tile_b=DEFAULT_TILE_B):
    B, D = embed_x.shape
    H1 = w1.shape[1]
    H2 = w2.shape[1]

    tb = max(128, min(_round_up(tile_b, 128), _round_up(B, 128)))
    b_pad = _round_up(B, tb)
    num_tiles = b_pad // tb

    dom = domain_id.astype(jnp.int32)
    if b_pad != B:
        embed_x = jnp.pad(embed_x, ((0, b_pad - B), (0, 0)))
        dom = jnp.pad(dom, (0, b_pad - B), constant_values=-1)   # out-of-range -> 0, sliced off
    dom = dom.reshape(num_tiles, 1, tb)                          # lane-dense view (free reshape)

    args = (embed_x, dom, cw, cb, w1, b1, w2, b2,
            wlr_cn.reshape(1, D), wlr_mlp.reshape(1, H2), blr.reshape(1, 1))

    def const(shape):                                            # resident weight: DMA'd once
        return pl.BlockSpec(shape, lambda i: (0,) * len(shape))

    out = pl.pallas_call(
        dcn_md_kernel,
        grid=(num_tiles,),
        in_specs=[
            pl.BlockSpec((tb, D), lambda i: (i, 0)),             # embed_x: streamed batch tiles
            pl.BlockSpec((None, 1, tb), lambda i: (i, 0, 0)),    # domain ids, lane-dense
            const((N_CROSS, D)), const((N_CROSS, D)),            # cross w_l / b_l
            const((D, H1)), const((1, H1)),                      # mlp layer 1
            const((H1, H2)), const((1, H2)),                     # mlp layer 2
            const((1, D)), const((1, H2)),                       # LR weight split (cn / mlp)
            pl.BlockSpec(memory_space=pltpu.MemorySpace.SMEM),   # LR bias scalar
        ],
        out_specs=pl.BlockSpec((None, 1, tb), lambda i: (i, 0, 0)),
        out_shape=jax.ShapeDtypeStruct((num_tiles, 1, tb), jnp.float32),
        compiler_params=pltpu.CompilerParams(
            dimension_semantics=("parallel",),                   # megacore-shard batch on v7x
            vmem_limit_bytes=32 * 1024 * 1024,
        ),
    )(*args)
    return out.reshape(b_pad)[:B]                                # final.squeeze(1)


def embedding_lookup(tables, x_sparse):
    """EmbeddingLayer(..., squeeze_dim=True): concat per-feature lookups. (JAX glue)"""
    embs = [jnp.take(tables[i], x_sparse[:, i], axis=0) for i in range(len(tables))]
    return jnp.concatenate(embs, axis=1)


def dcn_md_reference(embed_x, domain_id, cw, cb, w1, b1, w2, b2, wlr_cn, wlr_mlp, blr):
    """Pure-JAX reference matching the PyTorch forward (f32 everywhere)."""
    x0 = embed_x
    x = x0
    for l in range(N_CROSS):
        xw = x @ cw[l][:, None]                       # (B, 1)
        x = x0 * (xw + cb[l][None, :]) + x
    cn_out = x
    h = jnp.maximum(x0 @ w1 + b1, 0.0)
    h = jnp.maximum(h @ w2 + b2, 0.0)
    y = cn_out @ wlr_cn + h @ wlr_mlp + blr
    sig = jax.nn.sigmoid(y)
    final = jnp.zeros_like(sig)
    for d in range(NUM_DOMAINS):
        final = jnp.where((domain_id == d)[:, None], sig, final)
    return final[:, 0]


if __name__ == "__main__":
    B = 512                # batch (padded/tiled by the wrapper as needed)
    n_feat = 4             # number of sparse features
    embed_dim = 8          # per-feature embed_dim
    vocab = 10
    D = n_feat * embed_dim       # self.dims = 32
    H1, H2 = MLP_DIMS

    key = jax.random.PRNGKey(0)
    ks = jax.random.split(key, 12)

    # Deterministic synthetic parameters (shapes implied by the module __init__).
    tables = [0.1 * jax.random.normal(ks[i], (vocab, embed_dim), jnp.float32)
              for i in range(n_feat)]
    cw = 0.1 * jax.random.normal(ks[4], (N_CROSS, D), jnp.float32)    # cross w_l (D->1 each)
    cb = 0.01 * jax.random.normal(ks[11], (N_CROSS, D), jnp.float32)  # cross b_l (D,)
    w1 = 0.1 * jax.random.normal(ks[5], (D, H1), jnp.float32)
    b1 = jnp.zeros((1, H1), jnp.float32)
    w2 = 0.1 * jax.random.normal(ks[6], (H1, H2), jnp.float32)
    b2 = jnp.zeros((1, H2), jnp.float32)
    wlr_cn = 0.1 * jax.random.normal(ks[7], (D, 1), jnp.float32)      # LR weight, first D rows
    wlr_mlp = 0.1 * jax.random.normal(ks[8], (H2, 1), jnp.float32)    # LR weight, last H2 rows
    blr = jnp.zeros((1, 1), jnp.float32)

    # Synthetic input dict: sparse feature ids + domain indicator.
    x_sparse = jax.random.randint(ks[9], (B, n_feat), 0, vocab, dtype=jnp.int32)
    domain_id = jax.random.randint(ks[10], (B,), 0, NUM_DOMAINS, dtype=jnp.int32)

    embed_x = embedding_lookup(tables, x_sparse)          # (B, D)

    out = dcn_md_forward(embed_x, domain_id,
                         cw, cb, w1, b1, w2, b2, wlr_cn, wlr_mlp, blr,
                         tile_b=128)                      # small tile -> 4 pipelined grid steps
    jax.block_until_ready(out)
    assert out.shape == (B,)

    ref = dcn_md_reference(embed_x, domain_id, cw, cb, w1, b1, w2, b2,
                           wlr_cn, wlr_mlp, blr)
    np.testing.assert_allclose(np.asarray(out), np.asarray(ref), atol=1e-2, rtol=0.0)

    print("KERNEL_OK")
</pallas_src>

<mosaic_0001>
module attributes {stable_mosaic.version = 11 : i64} {
  func.func @dcn_md_kernel(%arg0: i32, %arg1: memref<128x32xf32, #tpu.memory_space<vmem>>, %arg2: memref<1x1x128xi32, #tpu.memory_space<vmem>>, %arg3: memref<3x32xf32, #tpu.memory_space<vmem>>, %arg4: memref<3x32xf32, #tpu.memory_space<vmem>>, %arg5: memref<32x64xf32, #tpu.memory_space<vmem>>, %arg6: memref<1x64xf32, #tpu.memory_space<vmem>>, %arg7: memref<64x32xf32, #tpu.memory_space<vmem>>, %arg8: memref<1x32xf32, #tpu.memory_space<vmem>>, %arg9: memref<1x32xf32, #tpu.memory_space<vmem>>, %arg10: memref<1x32xf32, #tpu.memory_space<vmem>>, %arg11: memref<1x1xf32, #tpu.memory_space<smem>>, %arg12: memref<1x1x128xf32, #tpu.memory_space<vmem>>) attributes {dimension_semantics = [#tpu.dimension_semantics<parallel>], iteration_bounds = array<i64: 4>, scalar_prefetch = 0 : i64, scratch_operands = 0 : i64, tpu.core_type = #tpu.core_type<tc>, window_params = [{transform_indices = @transform_0, window_bounds = array<i64: 128, 32>}, {transform_indices = @transform_1, window_bounds = array<i64: 1, 1, 128>}, {pipeline_mode = #tpu.pipeline_mode<synchronous>, transform_indices = @transform_2, window_bounds = array<i64: 3, 32>}, {pipeline_mode = #tpu.pipeline_mode<synchronous>, transform_indices = @transform_3, window_bounds = array<i64: 3, 32>}, {pipeline_mode = #tpu.pipeline_mode<synchronous>, transform_indices = @transform_4, window_bounds = array<i64: 32, 64>}, {pipeline_mode = #tpu.pipeline_mode<synchronous>, transform_indices = @transform_5, window_bounds = array<i64: 1, 64>}, {pipeline_mode = #tpu.pipeline_mode<synchronous>, transform_indices = @transform_6, window_bounds = array<i64: 64, 32>}, {pipeline_mode = #tpu.pipeline_mode<synchronous>, transform_indices = @transform_7, window_bounds = array<i64: 1, 32>}, {pipeline_mode = #tpu.pipeline_mode<synchronous>, transform_indices = @transform_8, window_bounds = array<i64: 1, 32>}, {pipeline_mode = #tpu.pipeline_mode<synchronous>, transform_indices = @transform_9, window_bounds = array<i64: 1, 32>}, {transform_indices = @transform_10, window_bounds = array<i64: 1, 1>}, {transform_indices = @transform_11, window_bounds = array<i64: 1, 1, 128>}]} {
    %c0 = arith.constant 0 : index
    %c0_0 = arith.constant 0 : index
    %0 = vector.load %arg1[%c0, %c0_0] : memref<128x32xf32, #tpu.memory_space<vmem>>, vector<128x32xf32>
    %c0_1 = arith.constant 0 : index
    %c0_2 = arith.constant 0 : index
    %1 = vector.load %arg3[%c0_1, %c0_2] : memref<3x32xf32, #tpu.memory_space<vmem>>, vector<1x32xf32>
    %2 = vector.shape_cast %1 : vector<1x32xf32> to vector<32xf32>
    %c0_3 = arith.constant 0 : index
    %c0_4 = arith.constant 0 : index
    %3 = vector.load %arg4[%c0_3, %c0_4] : memref<3x32xf32, #tpu.memory_space<vmem>>, vector<1x32xf32>
    %4 = vector.shape_cast %3 : vector<1x32xf32> to vector<32xf32>
    %5 = vector.shape_cast %2 : vector<32xf32> to vector<1x32xf32>
    %6 = vector.broadcast %5 : vector<1x32xf32> to vector<128x32xf32>
    %7 = arith.mulf %0, %6 : vector<128x32xf32>
    %cst = arith.constant dense<0.000000e+00> : vector<128xf32>
    %8 = vector.multi_reduction <add>, %7, %cst [1] : vector<128x32xf32> to vector<128xf32>
    %9 = vector.shape_cast %8 : vector<128xf32> to vector<128x1xf32>
    %10 = vector.shape_cast %4 : vector<32xf32> to vector<1x32xf32>
    %11 = vector.broadcast %9 : vector<128x1xf32> to vector<128x32xf32>
    %12 = vector.broadcast %10 : vector<1x32xf32> to vector<128x32xf32>
    %13 = arith.addf %11, %12 : vector<128x32xf32>
    %14 = arith.mulf %0, %13 : vector<128x32xf32>
    %15 = arith.addf %14, %0 : vector<128x32xf32>
    %c1 = arith.constant 1 : index
    %c0_5 = arith.constant 0 : index
    %16 = vector.load %arg3[%c1, %c0_5] : memref<3x32xf32, #tpu.memory_space<vmem>>, vector<1x32xf32>
    %17 = vector.shape_cast %16 : vector<1x32xf32> to vector<32xf32>
    %c1_6 = arith.constant 1 : index
    %c0_7 = arith.constant 0 : index
    %18 = vector.load %arg4[%c1_6, %c0_7] : memref<3x32xf32, #tpu.memory_space<vmem>>, vector<1x32xf32>
    %19 = vector.shape_cast %18 : vector<1x32xf32> to vector<32xf32>
    %20 = vector.shape_cast %17 : vector<32xf32> to vector<1x32xf32>
    %21 = vector.broadcast %20 : vector<1x32xf32> to vector<128x32xf32>
    %22 = arith.mulf %15, %21 : vector<128x32xf32>
    %cst_8 = arith.constant dense<0.000000e+00> : vector<128xf32>
    %23 = vector.multi_reduction <add>, %22, %cst_8 [1] : vector<128x32xf32> to vector<128xf32>
    %24 = vector.shape_cast %23 : vector<128xf32> to vector<128x1xf32>
    %25 = vector.shape_cast %19 : vector<32xf32> to vector<1x32xf32>
    %26 = vector.broadcast %24 : vector<128x1xf32> to vector<128x32xf32>
    %27 = vector.broadcast %25 : vector<1x32xf32> to vector<128x32xf32>
    %28 = arith.addf %26, %27 : vector<128x32xf32>
    %29 = arith.mulf %0, %28 : vector<128x32xf32>
    %30 = arith.addf %29, %15 : vector<128x32xf32>
    %c2 = arith.constant 2 : index
    %c0_9 = arith.constant 0 : index
    %31 = vector.load %arg3[%c2, %c0_9] : memref<3x32xf32, #tpu.memory_space<vmem>>, vector<1x32xf32>
    %32 = vector.shape_cast %31 : vector<1x32xf32> to vector<32xf32>
    %c2_10 = arith.constant 2 : index
    %c0_11 = arith.constant 0 : index
    %33 = vector.load %arg4[%c2_10, %c0_11] : memref<3x32xf32, #tpu.memory_space<vmem>>, vector<1x32xf32>
    %34 = vector.shape_cast %33 : vector<1x32xf32> to vector<32xf32>
    %35 = vector.shape_cast %32 : vector<32xf32> to vector<1x32xf32>
    %36 = vector.broadcast %35 : vector<1x32xf32> to vector<128x32xf32>
    %37 = arith.mulf %30, %36 : vector<128x32xf32>
    %cst_12 = arith.constant dense<0.000000e+00> : vector<128xf32>
    %38 = vector.multi_reduction <add>, %37, %cst_12 [1] : vector<128x32xf32> to vector<128xf32>
    %39 = vector.shape_cast %38 : vector<128xf32> to vector<128x1xf32>
    %40 = vector.shape_cast %34 : vector<32xf32> to vector<1x32xf32>
    %41 = vector.broadcast %39 : vector<128x1xf32> to vector<128x32xf32>
    %42 = vector.broadcast %40 : vector<1x32xf32> to vector<128x32xf32>
    %43 = arith.addf %41, %42 : vector<128x32xf32>
    %44 = arith.mulf %0, %43 : vector<128x32xf32>
    %45 = arith.addf %44, %30 : vector<128x32xf32>
    %46 = arith.truncf %0 : vector<128x32xf32> to vector<128x32xbf16>
    %c0_13 = arith.constant 0 : index
    %c0_14 = arith.constant 0 : index
    %47 = vector.load %arg5[%c0_13, %c0_14] : memref<32x64xf32, #tpu.memory_space<vmem>>, vector<32x64xf32>
    %48 = arith.truncf %47 : vector<32x64xf32> to vector<32x64xbf16>
    %cst_15 = arith.constant dense<0.000000e+00> : vector<128x64xf32>
    %49 = tpu.matmul %46, %48, %cst_15 {dimension_numbers = #tpu.dot_dimension_numbers<[1], [0], [0], [1], [0, 0, 1, 1], [], []>} : vector<128x32xbf16>, vector<32x64xbf16>, vector<128x64xf32> -> vector<128x64xf32>
    %c0_16 = arith.constant 0 : index
    %c0_17 = arith.constant 0 : index
    %50 = vector.load %arg6[%c0_16, %c0_17] : memref<1x64xf32, #tpu.memory_space<vmem>>, vector<1x64xf32>
    %51 = vector.broadcast %50 : vector<1x64xf32> to vector<128x64xf32>
    %52 = arith.addf %49, %51 : vector<128x64xf32>
    %cst_18 = arith.constant 0.000000e+00 : f32
    %53 = vector.broadcast %cst_18 : f32 to vector<128x64xf32>
    %54 = arith.maximumf %52, %53 : vector<128x64xf32>
    %55 = arith.truncf %54 : vector<128x64xf32> to vector<128x64xbf16>
    %c0_19 = arith.constant 0 : index
    %c0_20 = arith.constant 0 : index
    %56 = vector.load %arg7[%c0_19, %c0_20] : memref<64x32xf32, #tpu.memory_space<vmem>>, vector<64x32xf32>
    %57 = arith.truncf %56 : vector<64x32xf32> to vector<64x32xbf16>
    %cst_21 = arith.constant dense<0.000000e+00> : vector<128x32xf32>
    %58 = tpu.matmul %55, %57, %cst_21 {dimension_numbers = #tpu.dot_dimension_numbers<[1], [0], [0], [1], [0, 0, 1, 1], [], []>} : vector<128x64xbf16>, vector<64x32xbf16>, vector<128x32xf32> -> vector<128x32xf32>
    %c0_22 = arith.constant 0 : index
    %c0_23 = arith.constant 0 : index
    %59 = vector.load %arg8[%c0_22, %c0_23] : memref<1x32xf32, #tpu.memory_space<vmem>>, vector<1x32xf32>
    %60 = vector.broadcast %59 : vector<1x32xf32> to vector<128x32xf32>
    %61 = arith.addf %58, %60 : vector<128x32xf32>
    %cst_24 = arith.constant 0.000000e+00 : f32
    %62 = vector.broadcast %cst_24 : f32 to vector<128x32xf32>
    %63 = arith.maximumf %61, %62 : vector<128x32xf32>
    %c0_25 = arith.constant 0 : index
    %c0_26 = arith.constant 0 : index
    %64 = vector.load %arg9[%c0_25, %c0_26] : memref<1x32xf32, #tpu.memory_space<vmem>>, vector<1x32xf32>
    %65 = vector.broadcast %64 : vector<1x32xf32> to vector<128x32xf32>
    %66 = arith.mulf %45, %65 : vector<128x32xf32>
    %cst_27 = arith.constant dense<0.000000e+00> : vector<128xf32>
    %67 = vector.multi_reduction <add>, %66, %cst_27 [1] : vector<128x32xf32> to vector<128xf32>
    %c0_28 = arith.constant 0 : index
    %c0_29 = arith.constant 0 : index
    %68 = vector.load %arg10[%c0_28, %c0_29] : memref<1x32xf32, #tpu.memory_space<vmem>>, vector<1x32xf32>
    %69 = vector.broadcast %68 : vector<1x32xf32> to vector<128x32xf32>
    %70 = arith.mulf %63, %69 : vector<128x32xf32>
    %cst_30 = arith.constant dense<0.000000e+00> : vector<128xf32>
    %71 = vector.multi_reduction <add>, %70, %cst_30 [1] : vector<128x32xf32> to vector<128xf32>
    %72 = arith.addf %67, %71 : vector<128xf32>
    %c0_31 = arith.constant 0 : index
    %c0_32 = arith.constant 0 : index
    %73 = memref.load %arg11[%c0_31, %c0_32] : memref<1x1xf32, #tpu.memory_space<smem>>
    %74 = vector.broadcast %73 : f32 to vector<128xf32>
    %75 = arith.addf %72, %74 : vector<128xf32>
    %cst_33 = arith.constant 0.000000e+00 : f32
    %76 = vector.broadcast %cst_33 : f32 to vector<128xf32>
    %77 = arith.subf %76, %75 : vector<128xf32>
    %78 = math.exp %77 : vector<128xf32>
    %cst_34 = arith.constant 1.000000e+00 : f32
    %79 = vector.broadcast %cst_34 : f32 to vector<128xf32>
    %80 = arith.addf %79, %78 : vector<128xf32>
    %81 = tpu.reciprocal %80 {approx = true} : vector<128xf32> -> vector<128xf32>
    %c0_35 = arith.constant 0 : index
    %c0_36 = arith.constant 0 : index
    %c0_37 = arith.constant 0 : index
    %82 = vector.load %arg2[%c0_35, %c0_36, %c0_37] : memref<1x1x128xi32, #tpu.memory_space<vmem>>, vector<1x1x128xi32>
    %83 = vector.shape_cast %82 : vector<1x1x128xi32> to vector<1x128xi32>
    %c0_i32 = arith.constant 0 : i32
    %84 = vector.broadcast %c0_i32 : i32 to vector<1x128xi32>
    %85 = arith.cmpi sge, %83, %84 : vector<1x128xi32>
    %c3_i32 = arith.constant 3 : i32
    %86 = vector.broadcast %c3_i32 : i32 to vector<1x128xi32>
    %87 = arith.cmpi slt, %83, %86 : vector<1x128xi32>
    %88 = arith.andi %85, %87 : vector<1x128xi1>
    %89 = vector.shape_cast %81 : vector<128xf32> to vector<1x128xf32>
    %cst_38 = arith.constant 0.000000e+00 : f32
    %90 = vector.broadcast %cst_38 : f32 to vector<1x128xf32>
    %91 = arith.select %88, %89, %90 : vector<1x128xi1>, vector<1x128xf32>
    %c0_39 = arith.constant 0 : index
    %c0_40 = arith.constant 0 : index
    %c0_41 = arith.constant 0 : index
    %92 = vector.load %arg12[%c0_39, %c0_40, %c0_41] : memref<1x1x128xf32, #tpu.memory_space<vmem>>, vector<1x1x128xf32>
    %93 = vector.shape_cast %92 : vector<1x1x128xf32> to vector<1x128xf32>
    %94 = vector.shape_cast %91 : vector<1x128xf32> to vector<1x1x128xf32>
    tpu.vector_store %arg12[%c0_39, %c0_40, %c0_41], %94 {strides = array<i32>} : memref<1x1x128xf32, #tpu.memory_space<vmem>>, vector<1x1x128xf32>,
    return
  }
  func.func @transform_0(%arg0: i32) -> (i32, i32) {
    %c0_i32 = arith.constant 0 : i32
    %c0_i32_0 = arith.constant 0 : i32
    return %arg0, %c0_i32 : i32, i32
  }
  func.func @transform_1(%arg0: i32) -> (i32, i32, i32) {
    %c0_i32 = arith.constant 0 : i32
    %c0_i32_0 = arith.constant 0 : i32
    %c0_i32_1 = arith.constant 0 : i32
    return %arg0, %c0_i32, %c0_i32_0 : i32, i32, i32
  }
  func.func @transform_2(%arg0: i32) -> (i32, i32) {
    %c0_i32 = arith.constant 0 : i32
    %c0_i32_0 = arith.constant 0 : i32
    %c0_i32_1 = arith.constant 0 : i32
    return %c0_i32, %c0_i32_0 : i32, i32
  }
  func.func @transform_3(%arg0: i32) -> (i32, i32) {
    %c0_i32 = arith.constant 0 : i32
    %c0_i32_0 = arith.constant 0 : i32
    %c0_i32_1 = arith.constant 0 : i32
    return %c0_i32, %c0_i32_0 : i32, i32
  }
  func.func @transform_4(%arg0: i32) -> (i32, i32) {
    %c0_i32 = arith.constant 0 : i32
    %c0_i32_0 = arith.constant 0 : i32
    %c0_i32_1 = arith.constant 0 : i32
    return %c0_i32, %c0_i32_0 : i32, i32
  }
  func.func @transform_5(%arg0: i32) -> (i32, i32) {
    %c0_i32 = arith.constant 0 : i32
    %c0_i32_0 = arith.constant 0 : i32
    %c0_i32_1 = arith.constant 0 : i32
    return %c0_i32, %c0_i32_0 : i32, i32
  }
  func.func @transform_6(%arg0: i32) -> (i32, i32) {
    %c0_i32 = arith.constant 0 : i32
    %c0_i32_0 = arith.constant 0 : i32
    %c0_i32_1 = arith.constant 0 : i32
    return %c0_i32, %c0_i32_0 : i32, i32
  }
  func.func @transform_7(%arg0: i32) -> (i32, i32) {
    %c0_i32 = arith.constant 0 : i32
    %c0_i32_0 = arith.constant 0 : i32
    %c0_i32_1 = arith.constant 0 : i32
    return %c0_i32, %c0_i32_0 : i32, i32
  }
  func.func @transform_8(%arg0: i32) -> (i32, i32) {
    %c0_i32 = arith.constant 0 : i32
    %c0_i32_0 = arith.constant 0 : i32
    %c0_i32_1 = arith.constant 0 : i32
    return %c0_i32, %c0_i32_0 : i32, i32
  }
  func.func @transform_9(%arg0: i32) -> (i32, i32) {
    %c0_i32 = arith.constant 0 : i32
    %c0_i32_0 = arith.constant 0 : i32
    %c0_i32_1 = arith.constant 0 : i32
    return %c0_i32, %c0_i32_0 : i32, i32
  }
  func.func @transform_10(%arg0: i32) -> (i32, i32) {
    %c0_i32 = arith.constant 0 : i32
    %c0_i32_0 = arith.constant 0 : i32
    %c0_i32_1 = arith.constant 0 : i32
    return %c0_i32, %c0_i32_0 : i32, i32
  }
  func.func @transform_11(%arg0: i32) -> (i32, i32, i32) {
    %c0_i32 = arith.constant 0 : i32
    %c0_i32_0 = arith.constant 0 : i32
    %c0_i32_1 = arith.constant 0 : i32
    return %arg0, %c0_i32, %c0_i32_0 : i32, i32, i32
  }
}

</mosaic_0001>

<llo_original>
// kernel: dcn_md_forward.1
$region0: #{dcn_md_forward.1}
  #allocation0 [shape = 'u32[]', space=smem, size = 0x4, offset = 0x4, fixed_abs, tag = 'smem constant byte address 0x4 - core index']
  #allocation1 [shape = 'u32[72,128]{1,0:T(1,128)}', space=vmem, size = 0x9000, scoped, tag = 'internal scratch']
  #allocation2 [shape = 'f32[1,1]{1,0:T(1,128)S(6)}', space=smem, size = 0x200, scoped, tag = 'scoped memory for dcn_md_forward.1']
  %s0 = inlined_call_operand.vmem [shape: f32[512,32], index: 0, kind: input, shape index: {}]
  %s1 = inlined_call_operand.vmem [shape: s32[4,1,128], index: 1, kind: input, shape index: {}]
  %s2 = inlined_call_operand.vmem [shape: f32[3,32], index: 2, kind: input, shape index: {}]
  %s3 = inlined_call_operand.vmem [shape: f32[3,32], index: 3, kind: input, shape index: {}]
  %s4 = inlined_call_operand.vmem [shape: f32[32,64], index: 4, kind: input, shape index: {}]
  %s5 = inlined_call_operand.vmem [shape: f32[1,64], index: 5, kind: input, shape index: {}]
  %s6 = inlined_call_operand.vmem [shape: f32[64,32], index: 6, kind: input, shape index: {}]
  %s7 = inlined_call_operand.vmem [shape: f32[1,32], index: 7, kind: input, shape index: {}]
  %s8 = inlined_call_operand.vmem [shape: f32[1,32], index: 8, kind: input, shape index: {}]
  %s9 = inlined_call_operand.vmem [shape: f32[1,32], index: 9, kind: input, shape index: {}]
  %s10 = inlined_call_operand.<no memory space> [shape: f32[1,1], index: 10, kind: input, shape index: {}]
  %s11 = inlined_call_operand.hbm [shape: f32[4,1,128], index: 11, kind: output, shape index: {}]
  %s12 = sld [smem:[#allocation0]]
  $region77: #{dcn_md_forward.1} parent=0
    _
  %s14 = ssub.s32 1, %s12
  %s15 = scalar_select 0, %s14, %s12
  %16 = sst [smem:[#allocation2]] %s10
  $region1: #{dcn_md_forward.1} parent=0
    #allocation3 [shape = 'u8[1024]{0}', space=vmem, size = 0x400, scoped, tag = 'output window, operand 0']
    #allocation4 [shape = 's32[2]{0}', space=sflag, size = 0x8, scoped, tag = 'scoped memory for dcn_md_forward.1']
    %17 = vsyncpa [#allocation4], 0
    %s18 = scalar_lea.sflag [#allocation4], 1
    %19 = vsyncpa %s18, 0
    loop: start=0, step=1, limit=6
    $region2: #{dcn_md_forward.1} parent=1 // loop_pre_header
      _
    $region3: #{dcn_md_forward.1} parent=1 // loop_header
      %s21 = sphi 0, %s25
      %p22 = scmp.ge.s32.totalorder %s21, 6
      %s31 = sphi 0, %s33
      %s34 = sphi 0, %s31
      %s35 = sphi 0, %s34
      %s51 = sphi 0, %s35
      %s57 = sphi 0, %s59
      %s60 = sphi 0, %s57
      %s61 = sphi 0, %s60
      %s77 = sphi 0, %s61
      %s81 = sphi 0, %s81
      %s83 = sphi 0, %s81
      %s84 = sphi 0, %s83
      %s98 = sphi 0, %s84
      %s102 = sphi 0, %s102
      %s104 = sphi 0, %s102
      %s105 = sphi 0, %s104
      %s119 = sphi 0, %s105
      %s123 = sphi 0, %s123
      %s125 = sphi 0, %s123
      %s126 = sphi 0, %s125
      %s140 = sphi 0, %s126
      %s144 = sphi 0, %s144
      %s146 = sphi 0, %s144
      %s147 = sphi 0, %s146
      %s161 = sphi 0, %s147
      %s165 = sphi 0, %s165
      %s167 = sphi 0, %s165
      %s168 = sphi 0, %s167
      %s182 = sphi 0, %s168
      %s186 = sphi 0, %s186
      %s188 = sphi 0, %s186
      %s189 = sphi 0, %s188
      %s203 = sphi 0, %s189
      %s207 = sphi 0, %s207
      %s209 = sphi 0, %s207
      %s210 = sphi 0, %s209
      %s224 = sphi 0, %s210
      %s228 = sphi 0, %s228
      %s230 = sphi 0, %s228
      %s231 = sphi 0, %s230
      %s245 = sphi 0, %s231
      %s249 = sphi 0, %s249
      %s251 = sphi 0, %s249
      %s252 = sphi 0, %s251
      %s266 = sphi 0, %s252
      %s272 = sphi 0, %s274
      %s275 = sphi 0, %s272
      %s276 = sphi 0, %s275
      %s292 = sphi 0, %s276
    $region4: #{dcn_md_forward.1} parent=1 // loop_header_branch
      %24 = sbr.rel (%p22) target = $region8
    $region5: #{dcn_md_forward.1} parent=1 // loop_body
      %s26 = ssub.s32 %s21, 1
      %s27 = ssub.s32 %s21, 2
      %s28 = sadd.s32 %s21, 1
      %s29 = ssub.s32 %s21, %s28
      %p30 = scmp.eq.s32.totalorder %s29, 0
      %s32 = sadd.s32 %s31, 1
      %s33 = scalar_select %p30, %s31, %s32
      %p36 = pneg %p30
      %p37 = scmp.eq.s32.totalorder %s21, 3
      %p38 = por %p36, %p37
      %p39 = scmp.ne.s32.totalorder %s31, %s34
      %p40 = scmp.eq.s32.totalorder %s21, 0
      %p41 = por %p39, %p40
      %p42 = scmp.ne.s32.totalorder %s31, %s34
      %p43 = scmp.eq.s32.totalorder %s26, 3
      %p44 = por %p42, %p43
      %p45 = scmp.ne.s32.totalorder %s34, %s35
      %p46 = scmp.eq.s32.totalorder %s26, 0
      %p47 = por %p45, %p46
      %p48 = scmp.ne.s32.totalorder %s34, %s35
      %p49 = scmp.eq.s32.totalorder %s27, 3
      %p50 = por %p48, %p49
      %p52 = scmp.ne.s32.totalorder %s35, %s51
      %p53 = scmp.eq.s32.totalorder %s27, 0
      %p54 = por %p52, %p53
      %s55 = ssub.s32 %s21, %s28
      %p56 = scmp.eq.s32.totalorder %s55, 0
      %s58 = sadd.s32 %s57, 1
      %s59 = scalar_select %p56, %s57, %s58
      %p62 = pneg %p56
      %p63 = scmp.eq.s32.totalorder %s21, 3
      %p64 = por %p62, %p63
      %p65 = scmp.ne.s32.totalorder %s57, %s60
      %p66 = scmp.eq.s32.totalorder %s21, 0
      %p67 = por %p65, %p66
      %p68 = scmp.ne.s32.totalorder %s57, %s60
      %p69 = scmp.eq.s32.totalorder %s26, 3
      %p70 = por %p68, %p69
      %p71 = scmp.ne.s32.totalorder %s60, %s61
      %p72 = scmp.eq.s32.totalorder %s26, 0
      %p73 = por %p71, %p72
      %p74 = scmp.ne.s32.totalorder %s60, %s61
      %p75 = scmp.eq.s32.totalorder %s27, 3
      %p76 = por %p74, %p75
      %p78 = scmp.ne.s32.totalorder %s61, %s77
      %p79 = scmp.eq.s32.totalorder %s27, 0
      %p80 = por %p78, %p79
      %s82 = sadd.s32 %s81, 1
      %p85 = scmp.eq.s32.totalorder %s21, 3
      %p86 = scmp.ne.s32.totalorder %s81, %s83
      %p87 = scmp.eq.s32.totalorder %s21, 0
      %p88 = por %p86, %p87
      %p89 = scmp.ne.s32.totalorder %s81, %s83
      %p90 = scmp.eq.s32.totalorder %s26, 3
      %p91 = por %p89, %p90
      %p92 = scmp.ne.s32.totalorder %s83, %s84
      %p93 = scmp.eq.s32.totalorder %s26, 0
      %p94 = por %p92, %p93
      %p95 = scmp.ne.s32.totalorder %s83, %s84
      %p96 = scmp.eq.s32.totalorder %s27, 3
      %p97 = por %p95, %p96
      %p99 = scmp.ne.s32.totalorder %s84, %s98
      %p100 = scmp.eq.s32.totalorder %s27, 0
      %p101 = por %p99, %p100
      %s103 = sadd.s32 %s102, 1
      %p106 = scmp.eq.s32.totalorder %s21, 3
      %p107 = scmp.ne.s32.totalorder %s102, %s104
      %p108 = scmp.eq.s32.totalorder %s21, 0
      %p109 = por %p107, %p108
      %p110 = scmp.ne.s32.totalorder %s102, %s104
      %p111 = scmp.eq.s32.totalorder %s26, 3
      %p112 = por %p110, %p111
      %p113 = scmp.ne.s32.totalorder %s104, %s105
      %p114 = scmp.eq.s32.totalorder %s26, 0
      %p115 = por %p113, %p114
      %p116 = scmp.ne.s32.totalorder %s104, %s105
      %p117 = scmp.eq.s32.totalorder %s27, 3
      %p118 = por %p116, %p117
      %p120 = scmp.ne.s32.totalorder %s105, %s119
      %p121 = scmp.eq.s32.totalorder %s27, 0
      %p122 = por %p120, %p121
      %s124 = sadd.s32 %s123, 1
      %p127 = scmp.eq.s32.totalorder %s21, 3
      %p128 = scmp.ne.s32.totalorder %s123, %s125
      %p129 = scmp.eq.s32.totalorder %s21, 0
      %p130 = por %p128, %p129
      %p131 = scmp.ne.s32.totalorder %s123, %s125
      %p132 = scmp.eq.s32.totalorder %s26, 3
      %p133 = por %p131, %p132
      %p134 = scmp.ne.s32.totalorder %s125, %s126
      %p135 = scmp.eq.s32.totalorder %s26, 0
      %p136 = por %p134, %p135
      %p137 = scmp.ne.s32.totalorder %s125, %s126
      %p138 = scmp.eq.s32.totalorder %s27, 3
      %p139 = por %p137, %p138
      %p141 = scmp.ne.s32.totalorder %s126, %s140
      %p142 = scmp.eq.s32.totalorder %s27, 0
      %p143 = por %p141, %p142
      %s145 = sadd.s32 %s144, 1
      %p148 = scmp.eq.s32.totalorder %s21, 3
      %p149 = scmp.ne.s32.totalorder %s144, %s146
      %p150 = scmp.eq.s32.totalorder %s21, 0
      %p151 = por %p149, %p150
      %p152 = scmp.ne.s32.totalorder %s144, %s146
      %p153 = scmp.eq.s32.totalorder %s26, 3
      %p154 = por %p152, %p153
      %p155 = scmp.ne.s32.totalorder %s146, %s147
      %p156 = scmp.eq.s32.totalorder %s26, 0
      %p157 = por %p155, %p156
      %p158 = scmp.ne.s32.totalorder %s146, %s147
      %p159 = scmp.eq.s32.totalorder %s27, 3
      %p160 = por %p158, %p159
      %p162 = scmp.ne.s32.totalorder %s147, %s161
      %p163 = scmp.eq.s32.totalorder %s27, 0
      %p164 = por %p162, %p163
      %s166 = sadd.s32 %s165, 1
      %p169 = scmp.eq.s32.totalorder %s21, 3
      %p170 = scmp.ne.s32.totalorder %s165, %s167
      %p171 = scmp.eq.s32.totalorder %s21, 0
      %p172 = por %p170, %p171
      %p173 = scmp.ne.s32.totalorder %s165, %s167
      %p174 = scmp.eq.s32.totalorder %s26, 3
      %p175 = por %p173, %p174
      %p176 = scmp.ne.s32.totalorder %s167, %s168
      %p177 = scmp.eq.s32.totalorder %s26, 0
      %p178 = por %p176, %p177
      %p179 = scmp.ne.s32.totalorder %s167, %s168
      %p180 = scmp.eq.s32.totalorder %s27, 3
      %p181 = por %p179, %p180
      %p183 = scmp.ne.s32.totalorder %s168, %s182
      %p184 = scmp.eq.s32.totalorder %s27, 0
      %p185 = por %p183, %p184
      %s187 = sadd.s32 %s186, 1
      %p190 = scmp.eq.s32.totalorder %s21, 3
      %p191 = scmp.ne.s32.totalorder %s186, %s188
      %p192 = scmp.eq.s32.totalorder %s21, 0
      %p193 = por %p191, %p192
      %p194 = scmp.ne.s32.totalorder %s186, %s188
      %p195 = scmp.eq.s32.totalorder %s26, 3
      %p196 = por %p194, %p195
      %p197 = scmp.ne.s32.totalorder %s188, %s189
      %p198 = scmp.eq.s32.totalorder %s26, 0
      %p199 = por %p197, %p198
      %p200 = scmp.ne.s32.totalorder %s188, %s189
      %p201 = scmp.eq.s32.totalorder %s27, 3
      %p202 = por %p200, %p201
      %p204 = scmp.ne.s32.totalorder %s189, %s203
      %p205 = scmp.eq.s32.totalorder %s27, 0
      %p206 = por %p204, %p205
      %s208 = sadd.s32 %s207, 1
      %p211 = scmp.eq.s32.totalorder %s21, 3
      %p212 = scmp.ne.s32.totalorder %s207, %s209
      %p213 = scmp.eq.s32.totalorder %s21, 0
      %p214 = por %p212, %p213
      %p215 = scmp.ne.s32.totalorder %s207, %s209
      %p216 = scmp.eq.s32.totalorder %s26, 3
      %p217 = por %p215, %p216
      %p218 = scmp.ne.s32.totalorder %s209, %s210
      %p219 = scmp.eq.s32.totalorder %s26, 0
      %p220 = por %p218, %p219
      %p221 = scmp.ne.s32.totalorder %s209, %s210
      %p222 = scmp.eq.s32.totalorder %s27, 3
      %p223 = por %p221, %p222
      %p225 = scmp.ne.s32.totalorder %s210, %s224
      %p226 = scmp.eq.s32.totalorder %s27, 0
      %p227 = por %p225, %p226
      %s229 = sadd.s32 %s228, 1
      %p232 = scmp.eq.s32.totalorder %s21, 3
      %p233 = scmp.ne.s32.totalorder %s228, %s230
      %p234 = scmp.eq.s32.totalorder %s21, 0
      %p235 = por %p233, %p234
      %p236 = scmp.ne.s32.totalorder %s228, %s230
      %p237 = scmp.eq.s32.totalorder %s26, 3
      %p238 = por %p236, %p237
      %p239 = scmp.ne.s32.totalorder %s230, %s231
      %p240 = scmp.eq.s32.totalorder %s26, 0
      %p241 = por %p239, %p240
      %p242 = scmp.ne.s32.totalorder %s230, %s231
      %p243 = scmp.eq.s32.totalorder %s27, 3
      %p244 = por %p242, %p243
      %p246 = scmp.ne.s32.totalorder %s231, %s245
      %p247 = scmp.eq.s32.totalorder %s27, 0
      %p248 = por %p246, %p247
      %s250 = sadd.s32 %s249, 1
      %p253 = scmp.eq.s32.totalorder %s21, 3
      %p254 = scmp.ne.s32.totalorder %s249, %s251
      %p255 = scmp.eq.s32.totalorder %s21, 0
      %p256 = por %p254, %p255
      %p257 = scmp.ne.s32.totalorder %s249, %s251
      %p258 = scmp.eq.s32.totalorder %s26, 3
      %p259 = por %p257, %p258
      %p260 = scmp.ne.s32.totalorder %s251, %s252
      %p261 = scmp.eq.s32.totalorder %s26, 0
      %p262 = por %p260, %p261
      %p263 = scmp.ne.s32.totalorder %s251, %s252
      %p264 = scmp.eq.s32.totalorder %s27, 3
      %p265 = por %p263, %p264
      %p267 = scmp.ne.s32.totalorder %s252, %s266
      %p268 = scmp.eq.s32.totalorder %s27, 0
      %p269 = por %p267, %p268
      %s270 = ssub.s32 %s21, %s28
      %p271 = scmp.eq.s32.totalorder %s270, 0
      %s273 = sadd.s32 %s272, 1
      %s274 = scalar_select %p271, %s272, %s273
      %p277 = pneg %p271
      %p278 = scmp.eq.s32.totalorder %s21, 3
      %p279 = por %p277, %p278
      %p280 = scmp.ne.s32.totalorder %s272, %s275
      %p281 = scmp.eq.s32.totalorder %s21, 0
      %p282 = por %p280, %p281
      %p283 = scmp.ne.s32.totalorder %s272, %s275
      %p284 = scmp.eq.s32.totalorder %s26, 3
      %p285 = por %p283, %p284
      %p286 = scmp.ne.s32.totalorder %s275, %s276
      %p287 = scmp.eq.s32.totalorder %s26, 0
      %p288 = por %p286, %p287
      %p289 = scmp.ne.s32.totalorder %s275, %s276
      %p290 = scmp.eq.s32.totalorder %s27, 3
      %p291 = por %p289, %p290
      %p293 = scmp.ne.s32.totalorder %s276, %s292
      %p294 = scmp.eq.s32.totalorder %s27, 0
      %p295 = por %p293, %p294
      %p296 = scmp.le.s32.totalorder 1, %s21
      %p297 = scmp.lt.s32.totalorder %s21, 5
      %p298 = pnand %p296, %p297
      %p299 = pneg %p298
      // Predicated region
      $region9: #{dcn_md_forward.1} parent=5 // pred_check
        _
      $region10: #{dcn_md_forward.1} parent=5 // pred_check_branch
        %301 = sbr.rel (%p298) target = $region12
      $region11: #{dcn_md_forward.1} parent=5 // pred_region
        %s302 = ssub.s32 %s21, 1
        // Predicated region
        $region13: #{dcn_md_forward.1} parent=11 // pred_check
          %p303 = pneg %p94
        $region14: #{dcn_md_forward.1} parent=11 // pred_check_branch
          %305 = sbr.rel (%p303) target = $region16
        $region15: #{dcn_md_forward.1} parent=11 // pred_region
          _
        $region16: #{dcn_md_forward.1} parent=11 // pred_fallthru
          _
        // Predicated region
        $region17: #{dcn_md_forward.1} parent=11 // pred_check
          %p306 = pneg %p115
        $region18: #{dcn_md_forward.1} parent=11 // pred_check_branch
          %308 = sbr.rel (%p306) target = $region20
        $region19: #{dcn_md_forward.1} parent=11 // pred_region
          _
        $region20: #{dcn_md_forward.1} parent=11 // pred_fallthru
          _
        // Predicated region
        $region21: #{dcn_md_forward.1} parent=11 // pred_check
          %p309 = pneg %p136
        $region22: #{dcn_md_forward.1} parent=11 // pred_check_branch
          %311 = sbr.rel (%p309) target = $region24
        $region23: #{dcn_md_forward.1} parent=11 // pred_region
          _
        $region24: #{dcn_md_forward.1} parent=11 // pred_fallthru
          _
        // Predicated region
        $region25: #{dcn_md_forward.1} parent=11 // pred_check
          %p312 = pneg %p157
        $region26: #{dcn_md_forward.1} parent=11 // pred_check_branch
          %314 = sbr.rel (%p312) target = $region28
        $region27: #{dcn_md_forward.1} parent=11 // pred_region
          _
        $region28: #{dcn_md_forward.1} parent=11 // pred_fallthru
          _
        // Predicated region
        $region29: #{dcn_md_forward.1} parent=11 // pred_check
          %p315 = pneg %p178
        $region30: #{dcn_md_forward.1} parent=11 // pred_check_branch
          %317 = sbr.rel (%p315) target = $region32
        $region31: #{dcn_md_forward.1} parent=11 // pred_region
          _
        $region32: #{dcn_md_forward.1} parent=11 // pred_fallthru
          _
        // Predicated region
        $region33: #{dcn_md_forward.1} parent=11 // pred_check
          %p318 = pneg %p199
        $region34: #{dcn_md_forward.1} parent=11 // pred_check_branch
          %320 = sbr.rel (%p318) target = $region36
        $region35: #{dcn_md_forward.1} parent=11 // pred_region
          _
        $region36: #{dcn_md_forward.1} parent=11 // pred_fallthru
          _
        // Predicated region
        $region37: #{dcn_md_forward.1} parent=11 // pred_check
          %p321 = pneg %p220
        $region38: #{dcn_md_forward.1} parent=11 // pred_check_branch
          %323 = sbr.rel (%p321) target = $region40
        $region39: #{dcn_md_forward.1} parent=11 // pred_region
          _
        $region40: #{dcn_md_forward.1} parent=11 // pred_fallthru
          _
        // Predicated region
        $region41: #{dcn_md_forward.1} parent=11 // pred_check
          %p324 = pneg %p241
        $region42: #{dcn_md_forward.1} parent=11 // pred_check_branch
          %326 = sbr.rel (%p324) target = $region44
        $region43: #{dcn_md_forward.1} parent=11 // pred_region
          _
        $region44: #{dcn_md_forward.1} parent=11 // pred_fallthru
          _
        // Predicated region
        $region45: #{dcn_md_forward.1} parent=11 // pred_check
          %p327 = pneg %p262
        $region46: #{dcn_md_forward.1} parent=11 // pred_check_branch
          %329 = sbr.rel (%p327) target = $region48
        $region47: #{dcn_md_forward.1} parent=11 // pred_region
          _
        $region48: #{dcn_md_forward.1} parent=11 // pred_fallthru
          _
      $region12: #{dcn_md_forward.1} parent=5 // pred_fallthru
        _
      %p330 = scmp.lt.s32.totalorder %s21, 4
      // Predicated region
      $region49: #{dcn_md_forward.1} parent=5 // pred_check
        %p331 = pneg %p330
      $region50: #{dcn_md_forward.1} parent=5 // pred_check_branch
        %333 = sbr.rel (%p331) target = $region52
      $region51: #{dcn_md_forward.1} parent=5 // pred_region
        // Predicated region
        $region53: #{dcn_md_forward.1} parent=51 // pred_check
          %p334 = pneg %p41
        $region54: #{dcn_md_forward.1} parent=51 // pred_check_branch
          %336 = sbr.rel (%p334) target = $region56
        $region55: #{dcn_md_forward.1} parent=51 // pred_region
          %s337 = smul.u32 16, %s21
          %p338 = scmp.lt.s32.totalorder %s337, 63
          %s339 = scalar_select %p338, %s337, 63
          %s340 = smul.addr %s339, 8
          %s341 = scalar_lea.vmem %s0, %s340
          %s342 = smul.u32 16, %s21
        $region56: #{dcn_md_forward.1} parent=51 // pred_fallthru
          _
        // Predicated region
        $region57: #{dcn_md_forward.1} parent=51 // pred_check
          %p343 = pneg %p67
        $region58: #{dcn_md_forward.1} parent=51 // pred_check_branch
          %345 = sbr.rel (%p343) target = $region60
        $region59: #{dcn_md_forward.1} parent=51 // pred_region
          %p346 = scmp.lt.s32.totalorder %s21, 3
          %s347 = scalar_select %p346, %s21, 3
          %s348 = scalar_lea.vmem %s1, %s347
        $region60: #{dcn_md_forward.1} parent=51 // pred_fallthru
          _
      $region52: #{dcn_md_forward.1} parent=5 // pred_fallthru
        _
      %p349 = scmp.le.s32.totalorder 1, %s21
      %p350 = scmp.lt.s32.totalorder %s21, 5
      %p351 = pnand %p349, %p350
      %p352 = pneg %p351
      // Predicated region
      $region61: #{dcn_md_forward.1} parent=5 // pred_check
        _
      $region62: #{dcn_md_forward.1} parent=5 // pred_check_branch
        %354 = sbr.rel (%p351) target = $region64
      $region63: #{dcn_md_forward.1} parent=5 // pred_region
        %s355 = ssub.s32 %s21, 1
        %s356 = smul.u32 16, %s26
        %p357 = scmp.lt.s32.totalorder %s356, 63
        %s358 = scalar_select %p357, %s356, 63
        %s359 = smul.addr %s358, 8
        %s360 = scalar_lea.vmem %s0, %s359
        %p361 = pneg %p47
        %p362 = pneg %p44
        %p363 = scmp.lt.s32.totalorder %s26, 3
        %s364 = scalar_select %p363, %s26, 3
        %s365 = scalar_lea.vmem %s1, %s364
        %p366 = pneg %p73
        %p367 = pneg %p70
        %p368 = pneg %p94
        %p369 = pneg %p91
        %p370 = pneg %p115
        %p371 = pneg %p112
        %p372 = pneg %p136
        %p373 = pneg %p133
        %p374 = pneg %p157
        %p375 = pneg %p154
        %p376 = pneg %p178
        %p377 = pneg %p175
        %p378 = pneg %p199
        %p379 = pneg %p196
        %p380 = pneg %p220
        %p381 = pneg %p217
        %p382 = pneg %p241
        %p383 = pneg %p238
        %p384 = pneg %p262
        %p385 = pneg %p259
        %p386 = pneg %p288
        %p387 = pneg %p285
        %s388 = sand.u32 %s275, 1
        %s389 = scalar_lea.sflag [#allocation4], %s388
        %s390 = sand.u32 %s275, 1
        %s391 = scalar_lea.vmem [#allocation3], %s390
        %s392 = smul.u32 16, %s26
        %p393 = scmp.lt.s32.totalorder %s392, 63
        %s394 = scalar_select %p393, %s392, 63
        %s395 = smul.addr %s394, 8
        %s396 = scalar_lea.vmem %s0, %s395
        %s397 = smul.u32 16, %s26
        %p398 = scmp.lt.s32.totalorder %s26, 3
        %s399 = scalar_select %p398, %s26, 3
        %s400 = scalar_lea.vmem %s1, %s399
        %v402 = vld [vmem:[%s396] sm:$0xff]
        %v403 = vld [vmem:[%s396 + $0x8] sm:$0xff]
        %v404 = vld [vmem:[%s396 + $0x10] sm:$0xff]
        %v405 = vld [vmem:[%s396 + $0x18] sm:$0xff]
        %v406 = vld [vmem:[%s396 + $0x20] sm:$0xff]
        %v407 = vld [vmem:[%s396 + $0x28] sm:$0xff]
        %v408 = vld [vmem:[%s396 + $0x30] sm:$0xff]
        %v409 = vld [vmem:[%s396 + $0x38] sm:$0xff]
        %v410 = vld [vmem:[%s396 + $0x40] sm:$0xff]
        %v411 = vld [vmem:[%s396 + $0x48] sm:$0xff]
        %v412 = vld [vmem:[%s396 + $0x50] sm:$0xff]
        %v413 = vld [vmem:[%s396 + $0x58] sm:$0xff]
        %v414 = vld [vmem:[%s396 + $0x60] sm:$0xff]
        %v415 = vld [vmem:[%s396 + $0x68] sm:$0xff]
        %v416 = vld [vmem:[%s396 + $0x70] sm:$0xff]
        %v417 = vld [vmem:[%s396 + $0x78] sm:$0xff]
        %v418 = vld [vmem:[%s2] sm:$0x1]
        %v419 = vld [vmem:[%s3] sm:$0x1]
        %v420 = vperm.slane %v418, 0
        %v421 = vmul.f32 %v402, %v420
        %v422 = vmul.f32 %v403, %v420
        %v423 = vmul.f32 %v404, %v420
        %v424 = vmul.f32 %v405, %v420
        %v425 = vmul.f32 %v406, %v420
        %v426 = vmul.f32 %v407, %v420
        %v427 = vmul.f32 %v408, %v420
        %v428 = vmul.f32 %v409, %v420
        %v429 = vmul.f32 %v410, %v420
        %v430 = vmul.f32 %v411, %v420
        %v431 = vmul.f32 %v412, %v420
        %v432 = vmul.f32 %v413, %v420
        %v433 = vmul.f32 %v414, %v420
        %v434 = vmul.f32 %v415, %v420
        %v435 = vmul.f32 %v416, %v420
        %v436 = vmul.f32 %v417, %v420
        %vm437 = vcmask 261120
        %v438 = vsel %vm437, %v421, 0.0
        %439 = vadd.xlane.f32.xlu0 %v438
        %v440 = vpop.xlane.xlu0 %439
        %v441 = vsel %vm437, %v422, 0.0
        %442 = vadd.xlane.f32.xlu0 %v441
        %v443 = vpop.xlane.xlu0 %442
        %v444 = vsel %vm437, %v423, 0.0
        %445 = vadd.xlane.f32.xlu0 %v444
        %v446 = vpop.xlane.xlu0 %445
        %v447 = vsel %vm437, %v424, 0.0
        %448 = vadd.xlane.f32.xlu0 %v447
        %v449 = vpop.xlane.xlu0 %448
        %v450 = vsel %vm437, %v425, 0.0
        %451 = vadd.xlane.f32.xlu0 %v450
        %v452 = vpop.xlane.xlu0 %451
        %v453 = vsel %vm437, %v426, 0.0
        %454 = vadd.xlane.f32.xlu0 %v453
        %v455 = vpop.xlane.xlu0 %454
        %v456 = vsel %vm437, %v427, 0.0
        %457 = vadd.xlane.f32.xlu0 %v456
        %v458 = vpop.xlane.xlu0 %457
        %v459 = vsel %vm437, %v428, 0.0
        %460 = vadd.xlane.f32.xlu0 %v459
        %v461 = vpop.xlane.xlu0 %460
        %v462 = vsel %vm437, %v429, 0.0
        %463 = vadd.xlane.f32.xlu0 %v462
        %v464 = vpop.xlane.xlu0 %463
        %v465 = vsel %vm437, %v430, 0.0
        %466 = vadd.xlane.f32.xlu0 %v465
        %v467 = vpop.xlane.xlu0 %466
        %v468 = vsel %vm437, %v431, 0.0
        %469 = vadd.xlane.f32.xlu0 %v468
        %v470 = vpop.xlane.xlu0 %469
        %v471 = vsel %vm437, %v432, 0.0
        %472 = vadd.xlane.f32.xlu0 %v471
        %v473 = vpop.xlane.xlu0 %472
        %v474 = vsel %vm437, %v433, 0.0
        %475 = vadd.xlane.f32.xlu0 %v474
        %v476 = vpop.xlane.xlu0 %475
        %v477 = vsel %vm437, %v434, 0.0
        %478 = vadd.xlane.f32.xlu0 %v477
        %v479 = vpop.xlane.xlu0 %478
        %v480 = vsel %vm437, %v435, 0.0
        %481 = vadd.xlane.f32.xlu0 %v480
        %v482 = vpop.xlane.xlu0 %481
        %v483 = vsel %vm437, %v436, 0.0
        %484 = vadd.xlane.f32.xlu0 %v483
        %v485 = vpop.xlane.xlu0 %484
        %v486 = vperm.slane %v419, 0
        %v487 = vadd.f32 %v440, %v486
        %v488 = vadd.f32 %v443, %v486
        %v489 = vadd.f32 %v446, %v486
        %v490 = vadd.f32 %v449, %v486
        %v491 = vadd.f32 %v452, %v486
        %v492 = vadd.f32 %v455, %v486
        %v493 = vadd.f32 %v458, %v486
        %v494 = vadd.f32 %v461, %v486
        %v495 = vadd.f32 %v464, %v486
        %v496 = vadd.f32 %v467, %v486
        %v497 = vadd.f32 %v470, %v486
        %v498 = vadd.f32 %v473, %v486
        %v499 = vadd.f32 %v476, %v486
        %v500 = vadd.f32 %v479, %v486
        %v501 = vadd.f32 %v482, %v486
        %v502 = vadd.f32 %v485, %v486
        %v503 = vmul.f32 %v402, %v487
        %v504 = vmul.f32 %v403, %v488
        %v505 = vmul.f32 %v404, %v489
        %v506 = vmul.f32 %v405, %v490
        %v507 = vmul.f32 %v406, %v491
        %v508 = vmul.f32 %v407, %v492
        %v509 = vmul.f32 %v408, %v493
        %v510 = vmul.f32 %v409, %v494
        %v511 = vmul.f32 %v410, %v495
        %v512 = vmul.f32 %v411, %v496
        %v513 = vmul.f32 %v412, %v497
        %v514 = vmul.f32 %v413, %v498
        %v515 = vmul.f32 %v414, %v499
        %v516 = vmul.f32 %v415, %v500
        %v517 = vmul.f32 %v416, %v501
        %v518 = vmul.f32 %v417, %v502
        %v519 = vadd.f32 %v503, %v402
        %v520 = vadd.f32 %v504, %v403
        %v521 = vadd.f32 %v505, %v404
        %v522 = vadd.f32 %v506, %v405
        %v523 = vadd.f32 %v507, %v406
        %v524 = vadd.f32 %v508, %v407
        %v525 = vadd.f32 %v509, %v408
        %v526 = vadd.f32 %v510, %v409
        %v527 = vadd.f32 %v511, %v410
        %v528 = vadd.f32 %v512, %v411
        %v529 = vadd.f32 %v513, %v412
        %v530 = vadd.f32 %v514, %v413
        %v531 = vadd.f32 %v515, %v414
        %v532 = vadd.f32 %v516, %v415
        %v533 = vadd.f32 %v517, %v416
        %v534 = vadd.f32 %v518, %v417
        %v535 = vld [vmem:[%s2 + $0x1] sm:$0x1]
        %v536 = vld [vmem:[%s3 + $0x1] sm:$0x1]
        %v537 = vperm.slane %v535, 0
        %v538 = vmul.f32 %v519, %v537
        %v539 = vmul.f32 %v520, %v537
        %v540 = vmul.f32 %v521, %v537
        %v541 = vmul.f32 %v522, %v537
        %v542 = vmul.f32 %v523, %v537
        %v543 = vmul.f32 %v524, %v537
        %v544 = vmul.f32 %v525, %v537
        %v545 = vmul.f32 %v526, %v537
        %v546 = vmul.f32 %v527, %v537
        %v547 = vmul.f32 %v528, %v537
        %v548 = vmul.f32 %v529, %v537
        %v549 = vmul.f32 %v530, %v537
        %v550 = vmul.f32 %v531, %v537
        %v551 = vmul.f32 %v532, %v537
        %v552 = vmul.f32 %v533, %v537
        %v553 = vmul.f32 %v534, %v537
        %v554 = vsel %vm437, %v538, 0.0
        %555 = vadd.xlane.f32.xlu0 %v554
        %v556 = vpop.xlane.xlu0 %555
        %v557 = vsel %vm437, %v539, 0.0
        %558 = vadd.xlane.f32.xlu0 %v557
        %v559 = vpop.xlane.xlu0 %558
        %v560 = vsel %vm437, %v540, 0.0
        %561 = vadd.xlane.f32.xlu0 %v560
        %v562 = vpop.xlane.xlu0 %561
        %v563 = vsel %vm437, %v541, 0.0
        %564 = vadd.xlane.f32.xlu0 %v563
        %v565 = vpop.xlane.xlu0 %564
        %v566 = vsel %vm437, %v542, 0.0
        %567 = vadd.xlane.f32.xlu0 %v566
        %v568 = vpop.xlane.xlu0 %567
        %v569 = vsel %vm437, %v543, 0.0
        %570 = vadd.xlane.f32.xlu0 %v569
        %v571 = vpop.xlane.xlu0 %570
        %v572 = vsel %vm437, %v544, 0.0
        %573 = vadd.xlane.f32.xlu0 %v572
        %v574 = vpop.xlane.xlu0 %573
        %v575 = vsel %vm437, %v545, 0.0
        %576 = vadd.xlane.f32.xlu0 %v575
        %v577 = vpop.xlane.xlu0 %576
        %v578 = vsel %vm437, %v546, 0.0
        %579 = vadd.xlane.f32.xlu0 %v578
        %v580 = vpop.xlane.xlu0 %579
        %v581 = vsel %vm437, %v547, 0.0
        %582 = vadd.xlane.f32.xlu0 %v581
        %v583 = vpop.xlane.xlu0 %582
        %v584 = vsel %vm437, %v548, 0.0
        %585 = vadd.xlane.f32.xlu0 %v584
        %v586 = vpop.xlane.xlu0 %585
        %v587 = vsel %vm437, %v549, 0.0
        %588 = vadd.xlane.f32.xlu0 %v587
        %v589 = vpop.xlane.xlu0 %588
        %v590 = vsel %vm437, %v550, 0.0
        %591 = vadd.xlane.f32.xlu0 %v590
        %v592 = vpop.xlane.xlu0 %591
        %v593 = vsel %vm437, %v551, 0.0
        %594 = vadd.xlane.f32.xlu0 %v593
        %v595 = vpop.xlane.xlu0 %594
        %v596 = vsel %vm437, %v552, 0.0
        %597 = vadd.xlane.f32.xlu0 %v596
        %v598 = vpop.xlane.xlu0 %597
        %v599 = vsel %vm437, %v553, 0.0
        %600 = vadd.xlane.f32.xlu0 %v599
        %v601 = vpop.xlane.xlu0 %600
        %v602 = vperm.slane %v536, 0
        %v603 = vadd.f32 %v556, %v602
        %v604 = vadd.f32 %v559, %v602
        %v605 = vadd.f32 %v562, %v602
        %v606 = vadd.f32 %v565, %v602
        %v607 = vadd.f32 %v568, %v602
        %v608 = vadd.f32 %v571, %v602
        %v609 = vadd.f32 %v574, %v602
        %v610 = vadd.f32 %v577, %v602
        %v611 = vadd.f32 %v580, %v602
        %v612 = vadd.f32 %v583, %v602
        %v613 = vadd.f32 %v586, %v602
        %v614 = vadd.f32 %v589, %v602
        %v615 = vadd.f32 %v592, %v602
        %v616 = vadd.f32 %v595, %v602
        %v617 = vadd.f32 %v598, %v602
        %v618 = vadd.f32 %v601, %v602
        %v619 = vmul.f32 %v402, %v603
        %v620 = vmul.f32 %v403, %v604
        %v621 = vmul.f32 %v404, %v605
        %v622 = vmul.f32 %v405, %v606
        %v623 = vmul.f32 %v406, %v607
        %v624 = vmul.f32 %v407, %v608
        %v625 = vmul.f32 %v408, %v609
        %v626 = vmul.f32 %v409, %v610
        %v627 = vmul.f32 %v410, %v611
        %v628 = vmul.f32 %v411, %v612
        %v629 = vmul.f32 %v412, %v613
        %v630 = vmul.f32 %v413, %v614
        %v631 = vmul.f32 %v414, %v615
        %v632 = vmul.f32 %v415, %v616
        %v633 = vmul.f32 %v416, %v617
        %v634 = vmul.f32 %v417, %v618
        %v635 = vadd.f32 %v619, %v519
        %v636 = vadd.f32 %v620, %v520
        %v637 = vadd.f32 %v621, %v521
        %v638 = vadd.f32 %v622, %v522
        %v639 = vadd.f32 %v623, %v523
        %v640 = vadd.f32 %v624, %v524
        %v641 = vadd.f32 %v625, %v525
        %v642 = vadd.f32 %v626, %v526
        %v643 = vadd.f32 %v627, %v527
        %v644 = vadd.f32 %v628, %v528
        %v645 = vadd.f32 %v629, %v529
        %v646 = vadd.f32 %v630, %v530
        %v647 = vadd.f32 %v631, %v531
        %v648 = vadd.f32 %v632, %v532
        %v649 = vadd.f32 %v633, %v533
        %v650 = vadd.f32 %v634, %v534
        %v651 = vld [vmem:[%s2 + $0x2] sm:$0x1]
        %v652 = vld [vmem:[%s3 + $0x2] sm:$0x1]
        %v653 = vperm.slane %v651, 0
        %v654 = vmul.f32 %v635, %v653
        %v655 = vmul.f32 %v636, %v653
        %v656 = vmul.f32 %v637, %v653
        %v657 = vmul.f32 %v638, %v653
        %v658 = vmul.f32 %v639, %v653
        %v659 = vmul.f32 %v640, %v653
        %v660 = vmul.f32 %v641, %v653
        %v661 = vmul.f32 %v642, %v653
        %v662 = vmul.f32 %v643, %v653
        %v663 = vmul.f32 %v644, %v653
        %v664 = vmul.f32 %v645, %v653
        %v665 = vmul.f32 %v646, %v653
        %v666 = vmul.f32 %v647, %v653
        %v667 = vmul.f32 %v648, %v653
        %v668 = vmul.f32 %v649, %v653
        %v669 = vmul.f32 %v650, %v653
        %v670 = vsel %vm437, %v654, 0.0
        %671 = vadd.xlane.f32.xlu0 %v670
        %v672 = vpop.xlane.xlu0 %671
        %v673 = vsel %vm437, %v655, 0.0
        %674 = vadd.xlane.f32.xlu0 %v673
        %v675 = vpop.xlane.xlu0 %674
        %v676 = vsel %vm437, %v656, 0.0
        %677 = vadd.xlane.f32.xlu0 %v676
        %v678 = vpop.xlane.xlu0 %677
        %v679 = vsel %vm437, %v657, 0.0
        %680 = vadd.xlane.f32.xlu0 %v679
        %v681 = vpop.xlane.xlu0 %680
        %v682 = vsel %vm437, %v658, 0.0
        %683 = vadd.xlane.f32.xlu0 %v682
        %v684 = vpop.xlane.xlu0 %683
        %v685 = vsel %vm437, %v659, 0.0
        %686 = vadd.xlane.f32.xlu0 %v685
        %v687 = vpop.xlane.xlu0 %686
        %v688 = vsel %vm437, %v660, 0.0
        %689 = vadd.xlane.f32.xlu0 %v688
        %v690 = vpop.xlane.xlu0 %689
        %v691 = vsel %vm437, %v661, 0.0
        %692 = vadd.xlane.f32.xlu0 %v691
        %v693 = vpop.xlane.xlu0 %692
        %v694 = vsel %vm437, %v662, 0.0
        %695 = vadd.xlane.f32.xlu0 %v694
        %v696 = vpop.xlane.xlu0 %695
        %v697 = vsel %vm437, %v663, 0.0
        %698 = vadd.xlane.f32.xlu0 %v697
        %v699 = vpop.xlane.xlu0 %698
        %v700 = vsel %vm437, %v664, 0.0
        %701 = vadd.xlane.f32.xlu0 %v700
        %v702 = vpop.xlane.xlu0 %701
        %v703 = vsel %vm437, %v665, 0.0
        %704 = vadd.xlane.f32.xlu0 %v703
        %v705 = vpop.xlane.xlu0 %704
        %v706 = vsel %vm437, %v666, 0.0
        %707 = vadd.xlane.f32.xlu0 %v706
        %v708 = vpop.xlane.xlu0 %707
        %v709 = vsel %vm437, %v667, 0.0
        %710 = vadd.xlane.f32.xlu0 %v709
        %v711 = vpop.xlane.xlu0 %710
        %v712 = vsel %vm437, %v668, 0.0
        %713 = vadd.xlane.f32.xlu0 %v712
        %v714 = vpop.xlane.xlu0 %713
        %v715 = vsel %vm437, %v669, 0.0
        %716 = vadd.xlane.f32.xlu0 %v715
        %v717 = vpop.xlane.xlu0 %716
        %v718 = vperm.slane %v652, 0
        %v719 = vadd.f32 %v672, %v718
        %v720 = vadd.f32 %v675, %v718
        %v721 = vadd.f32 %v678, %v718
        %v722 = vadd.f32 %v681, %v718
        %v723 = vadd.f32 %v684, %v718
        %v724 = vadd.f32 %v687, %v718
        %v725 = vadd.f32 %v690, %v718
        %v726 = vadd.f32 %v693, %v718
        %v727 = vadd.f32 %v696, %v718
        %v728 = vadd.f32 %v699, %v718
        %v729 = vadd.f32 %v702, %v718
        %v730 = vadd.f32 %v705, %v718
        %v731 = vadd.f32 %v708, %v718
        %v732 = vadd.f32 %v711, %v718
        %v733 = vadd.f32 %v714, %v718
        %v734 = vadd.f32 %v717, %v718
        %v735 = vmul.f32 %v402, %v719
        %v736 = vmul.f32 %v403, %v720
        %v737 = vmul.f32 %v404, %v721
        %v738 = vmul.f32 %v405, %v722
        %v739 = vmul.f32 %v406, %v723
        %v740 = vmul.f32 %v407, %v724
        %v741 = vmul.f32 %v408, %v725
        %v742 = vmul.f32 %v409, %v726
        %v743 = vmul.f32 %v410, %v727
        %v744 = vmul.f32 %v411, %v728
        %v745 = vmul.f32 %v412, %v729
        %v746 = vmul.f32 %v413, %v730
        %v747 = vmul.f32 %v414, %v731
        %v748 = vmul.f32 %v415, %v732
        %v749 = vmul.f32 %v416, %v733
        %v750 = vmul.f32 %v417, %v734
        %v751 = vadd.f32 %v735, %v635
        %v752 = vadd.f32 %v736, %v636
        %v753 = vadd.f32 %v737, %v637
        %v754 = vadd.f32 %v738, %v638
        %v755 = vadd.f32 %v739, %v639
        %v756 = vadd.f32 %v740, %v640
        %v757 = vadd.f32 %v741, %v641
        %v758 = vadd.f32 %v742, %v642
        %v759 = vadd.f32 %v743, %v643
        %v760 = vadd.f32 %v744, %v644
        %v761 = vadd.f32 %v745, %v645
        %v762 = vadd.f32 %v746, %v646
        %v763 = vadd.f32 %v747, %v647
        %v764 = vadd.f32 %v748, %v648
        %v765 = vadd.f32 %v749, %v649
        %v766 = vadd.f32 %v750, %v650
        %v767 = vpack.c.bf16 %v403, %v402
        %v768 = vpack.c.bf16 %v405, %v404
        %v769 = vpack.c.bf16 %v407, %v406
        %v770 = vpack.c.bf16 %v409, %v408
        %v771 = vpack.c.bf16 %v411, %v410
        %v772 = vpack.c.bf16 %v413, %v412
        %v773 = vpack.c.bf16 %v415, %v414
        %v774 = vpack.c.bf16 %v417, %v416
        %v775 = vld [vmem:[%s4] sm:$0xff]
        %v776 = vld [vmem:[%s4 + $0x8] sm:$0xff]
        %v777 = vld [vmem:[%s4 + $0x10] sm:$0xff]
        %v778 = vld [vmem:[%s4 + $0x18] sm:$0xff]
        %v779 = vpack.c.bf16 %v776, %v775
        %v780 = vpack.c.bf16 %v778, %v777
        %v781 = vld [vmem:[%s5] sm:$0x1]
        %v783 = vperm.slane %v781, 0
        %v786 = vsel %vm437, %v767, 0
        %v789 = vsel %vm437, %v768, 0
        %v792 = vsel %vm437, %v769, 0
        %v795 = vsel %vm437, %v770, 0
        %v798 = vsel %vm437, %v771, 0
        %v801 = vsel %vm437, %v772, 0
        %v804 = vsel %vm437, %v773, 0
        %v807 = vsel %vm437, %v774, 0
        %809 = vmatpush.bf16.msra.mxu0 0
        %810 = vmatpush.bf16.msra.mxu0 0
        %811 = vmatpush.bf16.msra.mxu0 0
        %812 = vmatpush.bf16.msra.mxu0 0
        %813 = vmatpush.bf16.msra.mxu0 0
        %814 = vmatpush.bf16.msra.mxu0 0
        %815 = vmatpush.bf16.msra.mxu0 %v780
        %816 = vmatpush.bf16.msra.mxu0 %v779
        %817 = vmatmul.bf16.gmra.mxu0 %v786
        %v818 = vpop.f32.mrf.mxu0
        %v819 = vadd.f32 %v783, %v818
        %v820 = vpop.f32.mrf.mxu0
        %v821 = vadd.f32 %v783, %v820
        %822 = vmatmul.bf16.gmra.mxu0 %v789
        %v823 = vpop.f32.mrf.mxu0
        %v824 = vadd.f32 %v783, %v823
        %v825 = vpop.f32.mrf.mxu0
        %v826 = vadd.f32 %v783, %v825
        %827 = vmatmul.bf16.gmra.mxu0 %v792
        %v828 = vpop.f32.mrf.mxu0
        %v829 = vadd.f32 %v783, %v828
        %v830 = vpop.f32.mrf.mxu0
        %v831 = vadd.f32 %v783, %v830
        %832 = vmatmul.bf16.gmra.mxu0 %v795
        %v833 = vpop.f32.mrf.mxu0
        %v834 = vadd.f32 %v783, %v833
        %v835 = vpop.f32.mrf.mxu0
        %v836 = vadd.f32 %v783, %v835
        %837 = vmatmul.bf16.gmra.mxu0 %v798
        %v838 = vpop.f32.mrf.mxu0
        %v839 = vadd.f32 %v783, %v838
        %v840 = vpop.f32.mrf.mxu0
        %v841 = vadd.f32 %v783, %v840
        %842 = vmatmul.bf16.gmra.mxu0 %v801
        %v843 = vpop.f32.mrf.mxu0
        %v844 = vadd.f32 %v783, %v843
        %v845 = vpop.f32.mrf.mxu0
        %v846 = vadd.f32 %v783, %v845
        %847 = vmatmul.bf16.gmra.mxu0 %v804
        %v848 = vpop.f32.mrf.mxu0
        %v849 = vadd.f32 %v783, %v848
        %v850 = vpop.f32.mrf.mxu0
        %v851 = vadd.f32 %v783, %v850
        %852 = vmatmul.bf16.gmra.mxu0 %v807
        %v853 = vpop.f32.mrf.mxu0
        %v854 = vadd.f32 %v783, %v853
        %v855 = vpop.f32.mrf.mxu0
        %v856 = vadd.f32 %v783, %v855
        %857 = vdwg.mxu0
        %v858 = vmax.f32 %v819, 0.0
        %v859 = vmax.f32 %v821, 0.0
        %v860 = vmax.f32 %v824, 0.0
        %v861 = vmax.f32 %v826, 0.0
        %v862 = vmax.f32 %v829, 0.0
        %v863 = vmax.f32 %v831, 0.0
        %v864 = vmax.f32 %v834, 0.0
        %v865 = vmax.f32 %v836, 0.0
        %v866 = vmax.f32 %v839, 0.0
        %v867 = vmax.f32 %v841, 0.0
        %v868 = vmax.f32 %v844, 0.0
        %v869 = vmax.f32 %v846, 0.0
        %v870 = vmax.f32 %v849, 0.0
        %v871 = vmax.f32 %v851, 0.0
        %v872 = vmax.f32 %v854, 0.0
        %v873 = vmax.f32 %v856, 0.0
        %v874 = vpack.c.bf16 %v859, %v858
        %v875 = vpack.c.bf16 %v861, %v860
        %v876 = vpack.c.bf16 %v863, %v862
        %v877 = vpack.c.bf16 %v865, %v864
        %v878 = vpack.c.bf16 %v867, %v866
        %v879 = vpack.c.bf16 %v869, %v868
        %v880 = vpack.c.bf16 %v871, %v870
        %v881 = vpack.c.bf16 %v873, %v872
        %v882 = vld [vmem:[%s6] sm:$0xff]
        %v883 = vld [vmem:[%s6 + $0x8] sm:$0xff]
        %v884 = vld [vmem:[%s6 + $0x10] sm:$0xff]
        %v885 = vld [vmem:[%s6 + $0x18] sm:$0xff]
        %v886 = vld [vmem:[%s6 + $0x20] sm:$0xff]
        %v887 = vld [vmem:[%s6 + $0x28] sm:$0xff]
        %v888 = vld [vmem:[%s6 + $0x30] sm:$0xff]
        %v889 = vld [vmem:[%s6 + $0x38] sm:$0xff]
        %v890 = vpack.c.bf16 %v883, %v882
        %v891 = vpack.c.bf16 %v885, %v884
        %v892 = vpack.c.bf16 %v887, %v886
        %v893 = vpack.c.bf16 %v889, %v888
        %v894 = vld [vmem:[%s7] sm:$0x1]
        %v896 = vperm.slane %v894, 0
        %vm898 = vcmask 523264
        %v900 = vsel %vm898, %v874, 0
        %v903 = vsel %vm898, %v875, 0
        %v906 = vsel %vm898, %v876, 0
        %v909 = vsel %vm898, %v877, 0
        %v912 = vsel %vm898, %v878, 0
        %v915 = vsel %vm898, %v879, 0
        %v918 = vsel %vm898, %v880, 0
        %v921 = vsel %vm898, %v881, 0
        %923 = vmatpush.bf16.msra.mxu0 0
        %924 = vmatpush.bf16.msra.mxu0 0
        %925 = vmatpush.bf16.msra.mxu0 0
        %926 = vmatpush.bf16.msra.mxu0 0
        %927 = vmatpush.bf16.msra.mxu0 %v893
        %928 = vmatpush.bf16.msra.mxu0 %v892
        %929 = vmatpush.bf16.msra.mxu0 %v891
        %930 = vmatpush.bf16.msra.mxu0 %v890
        %931 = vmatmul.bf16.gmra.mxu0 %v900
        %v932 = vpop.f32.mrf.mxu0
        %v933 = vadd.f32 %v896, %v932
        %v934 = vpop.f32.mrf.mxu0
        %v935 = vadd.f32 %v896, %v934
        %936 = vmatmul.bf16.gmra.mxu0 %v903
        %v937 = vpop.f32.mrf.mxu0
        %v938 = vadd.f32 %v896, %v937
        %v939 = vpop.f32.mrf.mxu0
        %v940 = vadd.f32 %v896, %v939
        %941 = vmatmul.bf16.gmra.mxu0 %v906
        %v942 = vpop.f32.mrf.mxu0
        %v943 = vadd.f32 %v896, %v942
        %v944 = vpop.f32.mrf.mxu0
        %v945 = vadd.f32 %v896, %v944
        %946 = vmatmul.bf16.gmra.mxu0 %v909
        %v947 = vpop.f32.mrf.mxu0
        %v948 = vadd.f32 %v896, %v947
        %v949 = vpop.f32.mrf.mxu0
        %v950 = vadd.f32 %v896, %v949
        %951 = vmatmul.bf16.gmra.mxu0 %v912
        %v952 = vpop.f32.mrf.mxu0
        %v953 = vadd.f32 %v896, %v952
        %v954 = vpop.f32.mrf.mxu0
        %v955 = vadd.f32 %v896, %v954
        %956 = vmatmul.bf16.gmra.mxu0 %v915
        %v957 = vpop.f32.mrf.mxu0
        %v958 = vadd.f32 %v896, %v957
        %v959 = vpop.f32.mrf.mxu0
        %v960 = vadd.f32 %v896, %v959
        %961 = vmatmul.bf16.gmra.mxu0 %v918
        %v962 = vpop.f32.mrf.mxu0
        %v963 = vadd.f32 %v896, %v962
        %v964 = vpop.f32.mrf.mxu0
        %v965 = vadd.f32 %v896, %v964
        %966 = vmatmul.bf16.gmra.mxu0 %v921
        %v967 = vpop.f32.mrf.mxu0
        %v968 = vadd.f32 %v896, %v967
        %v969 = vpop.f32.mrf.mxu0
        %v970 = vadd.f32 %v896, %v969
        %971 = vdwg.mxu0
        %v972 = vmax.f32 %v933, 0.0
        %v973 = vmax.f32 %v935, 0.0
        %v974 = vmax.f32 %v938, 0.0
        %v975 = vmax.f32 %v940, 0.0
        %v976 = vmax.f32 %v943, 0.0
        %v977 = vmax.f32 %v945, 0.0
        %v978 = vmax.f32 %v948, 0.0
        %v979 = vmax.f32 %v950, 0.0
        %v980 = vmax.f32 %v953, 0.0
        %v981 = vmax.f32 %v955, 0.0
        %v982 = vmax.f32 %v958, 0.0
        %v983 = vmax.f32 %v960, 0.0
        %v984 = vmax.f32 %v963, 0.0
        %v985 = vmax.f32 %v965, 0.0
        %v986 = vmax.f32 %v968, 0.0
        %v987 = vmax.f32 %v970, 0.0
        %v988 = vld [vmem:[%s8] sm:$0x1]
        %v990 = vperm.slane %v988, 0
        %v992 = vmul.f32 %v751, %v990
        %v993 = vmul.f32 %v752, %v990
        %v994 = vmul.f32 %v753, %v990
        %v995 = vmul.f32 %v754, %v990
        %v996 = vmul.f32 %v755, %v990
        %v997 = vmul.f32 %v756, %v990
        %v998 = vmul.f32 %v757, %v990
        %v999 = vmul.f32 %v758, %v990
        %v1000 = vmul.f32 %v759, %v990
        %v1001 = vmul.f32 %v760, %v990
        %v1002 = vmul.f32 %v761, %v990
        %v1003 = vmul.f32 %v762, %v990
        %v1004 = vmul.f32 %v763, %v990
        %v1005 = vmul.f32 %v764, %v990
        %v1006 = vmul.f32 %v765, %v990
        %v1007 = vmul.f32 %v766, %v990
        %v1008 = vsel %vm437, %v992, 0.0
        %1009 = vadd.xlane.f32.xlu0 %v1008
        %v1010 = vpop.xlane.xlu0 %1009
        %v1011 = vsel %vm437, %v993, 0.0
        %1012 = vadd.xlane.f32.xlu0 %v1011
        %v1013 = vpop.xlane.xlu0 %1012
        %v1014 = vsel %vm437, %v994, 0.0
        %1015 = vadd.xlane.f32.xlu0 %v1014
        %v1016 = vpop.xlane.xlu0 %1015
        %v1017 = vsel %vm437, %v995, 0.0
        %1018 = vadd.xlane.f32.xlu0 %v1017
        %v1019 = vpop.xlane.xlu0 %1018
        %v1020 = vsel %vm437, %v996, 0.0
        %1021 = vadd.xlane.f32.xlu0 %v1020
        %v1022 = vpop.xlane.xlu0 %1021
        %v1023 = vsel %vm437, %v997, 0.0
        %1024 = vadd.xlane.f32.xlu0 %v1023
        %v1025 = vpop.xlane.xlu0 %1024
        %v1026 = vsel %vm437, %v998, 0.0
        %1027 = vadd.xlane.f32.xlu0 %v1026
        %v1028 = vpop.xlane.xlu0 %1027
        %v1029 = vsel %vm437, %v999, 0.0
        %1030 = vadd.xlane.f32.xlu0 %v1029
        %v1031 = vpop.xlane.xlu0 %1030
        %v1032 = vsel %vm437, %v1000, 0.0
        %1033 = vadd.xlane.f32.xlu0 %v1032
        %v1034 = vpop.xlane.xlu0 %1033
        %v1035 = vsel %vm437, %v1001, 0.0
        %1036 = vadd.xlane.f32.xlu0 %v1035
        %v1037 = vpop.xlane.xlu0 %1036
        %v1038 = vsel %vm437, %v1002, 0.0
        %1039 = vadd.xlane.f32.xlu0 %v1038
        %v1040 = vpop.xlane.xlu0 %1039
        %v1041 = vsel %vm437, %v1003, 0.0
        %1042 = vadd.xlane.f32.xlu0 %v1041
        %v1043 = vpop.xlane.xlu0 %1042
        %v1044 = vsel %vm437, %v1004, 0.0
        %1045 = vadd.xlane.f32.xlu0 %v1044
        %v1046 = vpop.xlane.xlu0 %1045
        %v1047 = vsel %vm437, %v1005, 0.0
        %1048 = vadd.xlane.f32.xlu0 %v1047
        %v1049 = vpop.xlane.xlu0 %1048
        %v1050 = vsel %vm437, %v1006, 0.0
        %1051 = vadd.xlane.f32.xlu0 %v1050
        %v1052 = vpop.xlane.xlu0 %1051
        %v1053 = vsel %vm437, %v1007, 0.0
        %1054 = vadd.xlane.f32.xlu0 %v1053
        %v1055 = vpop.xlane.xlu0 %1054
        %v1056 = vld [vmem:[%s9] sm:$0x1]
        %v1058 = vperm.slane %v1056, 0
        %v1060 = vmul.f32 %v972, %v1058
        %v1061 = vmul.f32 %v973, %v1058
        %v1062 = vmul.f32 %v974, %v1058
        %v1063 = vmul.f32 %v975, %v1058
        %v1064 = vmul.f32 %v976, %v1058
        %v1065 = vmul.f32 %v977, %v1058
        %v1066 = vmul.f32 %v978, %v1058
        %v1067 = vmul.f32 %v979, %v1058
        %v1068 = vmul.f32 %v980, %v1058
        %v1069 = vmul.f32 %v981, %v1058
        %v1070 = vmul.f32 %v982, %v1058
        %v1071 = vmul.f32 %v983, %v1058
        %v1072 = vmul.f32 %v984, %v1058
        %v1073 = vmul.f32 %v985, %v1058
        %v1074 = vmul.f32 %v986, %v1058
        %v1075 = vmul.f32 %v987, %v1058
        %v1076 = vsel %vm437, %v1060, 0.0
        %1077 = vadd.xlane.f32.xlu0 %v1076
        %v1078 = vpop.xlane.xlu0 %1077
        %v1079 = vsel %vm437, %v1061, 0.0
        %1080 = vadd.xlane.f32.xlu0 %v1079
        %v1081 = vpop.xlane.xlu0 %1080
        %v1082 = vsel %vm437, %v1062, 0.0
        %1083 = vadd.xlane.f32.xlu0 %v1082
        %v1084 = vpop.xlane.xlu0 %1083
        %v1085 = vsel %vm437, %v1063, 0.0
        %1086 = vadd.xlane.f32.xlu0 %v1085
        %v1087 = vpop.xlane.xlu0 %1086
        %v1088 = vsel %vm437, %v1064, 0.0
        %1089 = vadd.xlane.f32.xlu0 %v1088
        %v1090 = vpop.xlane.xlu0 %1089
        %v1091 = vsel %vm437, %v1065, 0.0
        %1092 = vadd.xlane.f32.xlu0 %v1091
        %v1093 = vpop.xlane.xlu0 %1092
        %v1094 = vsel %vm437, %v1066, 0.0
        %1095 = vadd.xlane.f32.xlu0 %v1094
        %v1096 = vpop.xlane.xlu0 %1095
        %v1097 = vsel %vm437, %v1067, 0.0
        %1098 = vadd.xlane.f32.xlu0 %v1097
        %v1099 = vpop.xlane.xlu0 %1098
        %v1100 = vsel %vm437, %v1068, 0.0
        %1101 = vadd.xlane.f32.xlu0 %v1100
        %v1102 = vpop.xlane.xlu0 %1101
        %v1103 = vsel %vm437, %v1069, 0.0
        %1104 = vadd.xlane.f32.xlu0 %v1103
        %v1105 = vpop.xlane.xlu0 %1104
        %v1106 = vsel %vm437, %v1070, 0.0
        %1107 = vadd.xlane.f32.xlu0 %v1106
        %v1108 = vpop.xlane.xlu0 %1107
        %v1109 = vsel %vm437, %v1071, 0.0
        %1110 = vadd.xlane.f32.xlu0 %v1109
        %v1111 = vpop.xlane.xlu0 %1110
        %v1112 = vsel %vm437, %v1072, 0.0
        %1113 = vadd.xlane.f32.xlu0 %v1112
        %v1114 = vpop.xlane.xlu0 %1113
        %v1115 = vsel %vm437, %v1073, 0.0
        %1116 = vadd.xlane.f32.xlu0 %v1115
        %v1117 = vpop.xlane.xlu0 %1116
        %v1118 = vsel %vm437, %v1074, 0.0
        %1119 = vadd.xlane.f32.xlu0 %v1118
        %v1120 = vpop.xlane.xlu0 %1119
        %v1121 = vsel %vm437, %v1075, 0.0
        %1122 = vadd.xlane.f32.xlu0 %v1121
        %v1123 = vpop.xlane.xlu0 %1122
        %v1124 = vadd.f32 %v1010, %v1078
        %v1125 = vadd.f32 %v1013, %v1081
        %v1126 = vadd.f32 %v1016, %v1084
        %v1127 = vadd.f32 %v1019, %v1087
        %v1128 = vadd.f32 %v1022, %v1090
        %v1129 = vadd.f32 %v1025, %v1093
        %v1130 = vadd.f32 %v1028, %v1096
        %v1131 = vadd.f32 %v1031, %v1099
        %v1132 = vadd.f32 %v1034, %v1102
        %v1133 = vadd.f32 %v1037, %v1105
        %v1134 = vadd.f32 %v1040, %v1108
        %v1135 = vadd.f32 %v1043, %v1111
        %v1136 = vadd.f32 %v1046, %v1114
        %v1137 = vadd.f32 %v1049, %v1117
        %v1138 = vadd.f32 %v1052, %v1120
        %v1139 = vadd.f32 %v1055, %v1123
        %s1140 = sld [smem:[#allocation2]]
        %v1141 = vstv %s1140
        %v1142 = vadd.f32 %v1124, %v1141
        %v1143 = vadd.f32 %v1125, %v1141
        %v1144 = vadd.f32 %v1126, %v1141
        %v1145 = vadd.f32 %v1127, %v1141
        %v1146 = vadd.f32 %v1128, %v1141
        %v1147 = vadd.f32 %v1129, %v1141
        %v1148 = vadd.f32 %v1130, %v1141
        %v1149 = vadd.f32 %v1131, %v1141
        %v1150 = vadd.f32 %v1132, %v1141
        %v1151 = vadd.f32 %v1133, %v1141
        %v1152 = vadd.f32 %v1134, %v1141
        %v1153 = vadd.f32 %v1135, %v1141
        %v1154 = vadd.f32 %v1136, %v1141
        %v1155 = vadd.f32 %v1137, %v1141
        %v1156 = vadd.f32 %v1138, %v1141
        %v1157 = vadd.f32 %v1139, %v1141
        %v1158 = vsub.f32 0.0, %v1142
        %v1159 = vsub.f32 0.0, %v1143
        %v1160 = vsub.f32 0.0, %v1144
        %v1161 = vsub.f32 0.0, %v1145
        %v1162 = vsub.f32 0.0, %v1146
        %v1163 = vsub.f32 0.0, %v1147
        %v1164 = vsub.f32 0.0, %v1148
        %v1165 = vsub.f32 0.0, %v1149
        %v1166 = vsub.f32 0.0, %v1150
        %v1167 = vsub.f32 0.0, %v1151
        %v1168 = vsub.f32 0.0, %v1152
        %v1169 = vsub.f32 0.0, %v1153
        %v1170 = vsub.f32 0.0, %v1154
        %v1171 = vsub.f32 0.0, %v1155
        %v1172 = vsub.f32 0.0, %v1156
        %v1173 = vsub.f32 0.0, %v1157
        %v1174 = vmul.f32 %v1158, 1.442695
        %v1175 = vpow.pop %v1174
        %v1176 = vmul.f32 %v1159, 1.442695
        %v1177 = vpow.pop %v1176
        %v1178 = vmul.f32 %v1160, 1.442695
        %v1179 = vpow.pop %v1178
        %v1180 = vmul.f32 %v1161, 1.442695
        %v1181 = vpow.pop %v1180
        %v1182 = vmul.f32 %v1162, 1.442695
        %v1183 = vpow.pop %v1182
        %v1184 = vmul.f32 %v1163, 1.442695
        %v1185 = vpow.pop %v1184
        %v1186 = vmul.f32 %v1164, 1.442695
        %v1187 = vpow.pop %v1186
        %v1188 = vmul.f32 %v1165, 1.442695
        %v1189 = vpow.pop %v1188
        %v1190 = vmul.f32 %v1166, 1.442695
        %v1191 = vpow.pop %v1190
        %v1192 = vmul.f32 %v1167, 1.442695
        %v1193 = vpow.pop %v1192
        %v1194 = vmul.f32 %v1168, 1.442695
        %v1195 = vpow.pop %v1194
        %v1196 = vmul.f32 %v1169, 1.442695
        %v1197 = vpow.pop %v1196
        %v1198 = vmul.f32 %v1170, 1.442695
        %v1199 = vpow.pop %v1198
        %v1200 = vmul.f32 %v1171, 1.442695
        %v1201 = vpow.pop %v1200
        %v1202 = vmul.f32 %v1172, 1.442695
        %v1203 = vpow.pop %v1202
        %v1204 = vmul.f32 %v1173, 1.442695
        %v1205 = vpow.pop %v1204
        %v1206 = vadd.f32 %v1175, 1.0
        %v1207 = vadd.f32 %v1177, 1.0
        %v1208 = vadd.f32 %v1179, 1.0
        %v1209 = vadd.f32 %v1181, 1.0
        %v1210 = vadd.f32 %v1183, 1.0
        %v1211 = vadd.f32 %v1185, 1.0
        %v1212 = vadd.f32 %v1187, 1.0
        %v1213 = vadd.f32 %v1189, 1.0
        %v1214 = vadd.f32 %v1191, 1.0
        %v1215 = vadd.f32 %v1193, 1.0
        %v1216 = vadd.f32 %v1195, 1.0
        %v1217 = vadd.f32 %v1197, 1.0
        %v1218 = vadd.f32 %v1199, 1.0
        %v1219 = vadd.f32 %v1201, 1.0
        %v1220 = vadd.f32 %v1203, 1.0
        %v1221 = vadd.f32 %v1205, 1.0
        %v1222 = vrcp.pop %v1206
        %v1223 = vrcp.pop %v1207
        %v1224 = vrcp.pop %v1208
        %v1225 = vrcp.pop %v1209
        %v1226 = vrcp.pop %v1210
        %v1227 = vrcp.pop %v1211
        %v1228 = vrcp.pop %v1212
        %v1229 = vrcp.pop %v1213
        %v1230 = vrcp.pop %v1214
        %v1231 = vrcp.pop %v1215
        %v1232 = vrcp.pop %v1216
        %v1233 = vrcp.pop %v1217
        %v1234 = vrcp.pop %v1218
        %v1235 = vrcp.pop %v1219
        %v1236 = vrcp.pop %v1220
        %v1237 = vrcp.pop %v1221
        %v1238 = vld [vmem:[%s400] sm:$0x1]
        %vm1239 = vcmp.ge.s32.totalorder %v1238, 0
        %vm1240 = vcmp.lt.s32.totalorder %v1238, 3
        %vm1241 = vmand %vm1239, %vm1240
        %v1258 = vperm.slane %v1222, 0
        %v1259 = vperm.slane %v1222, 1
        %v1260 = vperm.slane %v1222, 2
        %v1261 = vperm.slane %v1222, 3
        %v1262 = vperm.slane %v1222, 4
        %v1263 = vperm.slane %v1222, 5
        %v1264 = vperm.slane %v1222, 6
        %v1265 = vperm.slane %v1222, 7
        %v1266 = vperm.slane %v1223, 0
        %v1267 = vperm.slane %v1223, 1
        %v1268 = vperm.slane %v1223, 2
        %v1269 = vperm.slane %v1223, 3
        %v1270 = vperm.slane %v1223, 4
        %v1271 = vperm.slane %v1223, 5
        %v1272 = vperm.slane %v1223, 6
        %v1273 = vperm.slane %v1223, 7
        %v1274 = vperm.slane %v1224, 0
        %v1275 = vperm.slane %v1224, 1
        %v1276 = vperm.slane %v1224, 2
        %v1277 = vperm.slane %v1224, 3
        %v1278 = vperm.slane %v1224, 4
        %v1279 = vperm.slane %v1224, 5
        %v1280 = vperm.slane %v1224, 6
        %v1281 = vperm.slane %v1224, 7
        %v1282 = vperm.slane %v1225, 0
        %v1283 = vperm.slane %v1225, 1
        %v1284 = vperm.slane %v1225, 2
        %v1285 = vperm.slane %v1225, 3
        %v1286 = vperm.slane %v1225, 4
        %v1287 = vperm.slane %v1225, 5
        %v1288 = vperm.slane %v1225, 6
        %v1289 = vperm.slane %v1225, 7
        %v1290 = vperm.slane %v1226, 0
        %v1291 = vperm.slane %v1226, 1
        %v1292 = vperm.slane %v1226, 2
        %v1293 = vperm.slane %v1226, 3
        %v1294 = vperm.slane %v1226, 4
        %v1295 = vperm.slane %v1226, 5
        %v1296 = vperm.slane %v1226, 6
        %v1297 = vperm.slane %v1226, 7
        %v1298 = vperm.slane %v1227, 0
        %v1299 = vperm.slane %v1227, 1
        %v1300 = vperm.slane %v1227, 2
        %v1301 = vperm.slane %v1227, 3
        %v1302 = vperm.slane %v1227, 4
        %v1303 = vperm.slane %v1227, 5
        %v1304 = vperm.slane %v1227, 6
        %v1305 = vperm.slane %v1227, 7
        %v1306 = vperm.slane %v1228, 0
        %v1307 = vperm.slane %v1228, 1
        %v1308 = vperm.slane %v1228, 2
        %v1309 = vperm.slane %v1228, 3
        %v1310 = vperm.slane %v1228, 4
        %v1311 = vperm.slane %v1228, 5
        %v1312 = vperm.slane %v1228, 6
        %v1313 = vperm.slane %v1228, 7
        %v1314 = vperm.slane %v1229, 0
        %v1315 = vperm.slane %v1229, 1
        %v1316 = vperm.slane %v1229, 2
        %v1317 = vperm.slane %v1229, 3
        %v1318 = vperm.slane %v1229, 4
        %v1319 = vperm.slane %v1229, 5
        %v1320 = vperm.slane %v1229, 6
        %v1321 = vperm.slane %v1229, 7
        %v1322 = vperm.slane %v1230, 0
        %v1323 = vperm.slane %v1230, 1
        %v1324 = vperm.slane %v1230, 2
        %v1325 = vperm.slane %v1230, 3
        %v1326 = vperm.slane %v1230, 4
        %v1327 = vperm.slane %v1230, 5
        %v1328 = vperm.slane %v1230, 6
        %v1329 = vperm.slane %v1230, 7
        %v1330 = vperm.slane %v1231, 0
        %v1331 = vperm.slane %v1231, 1
        %v1332 = vperm.slane %v1231, 2
        %v1333 = vperm.slane %v1231, 3
        %v1334 = vperm.slane %v1231, 4
        %v1335 = vperm.slane %v1231, 5
        %v1336 = vperm.slane %v1231, 6
        %v1337 = vperm.slane %v1231, 7
        %v1338 = vperm.slane %v1232, 0
        %v1339 = vperm.slane %v1232, 1
        %v1340 = vperm.slane %v1232, 2
        %v1341 = vperm.slane %v1232, 3
        %v1342 = vperm.slane %v1232, 4
        %v1343 = vperm.slane %v1232, 5
        %v1344 = vperm.slane %v1232, 6
        %v1345 = vperm.slane %v1232, 7
        %v1346 = vperm.slane %v1233, 0
        %v1347 = vperm.slane %v1233, 1
        %v1348 = vperm.slane %v1233, 2
        %v1349 = vperm.slane %v1233, 3
        %v1350 = vperm.slane %v1233, 4
        %v1351 = vperm.slane %v1233, 5
        %v1352 = vperm.slane %v1233, 6
        %v1353 = vperm.slane %v1233, 7
        %v1354 = vperm.slane %v1234, 0
        %v1355 = vperm.slane %v1234, 1
        %v1356 = vperm.slane %v1234, 2
        %v1357 = vperm.slane %v1234, 3
        %v1358 = vperm.slane %v1234, 4
        %v1359 = vperm.slane %v1234, 5
        %v1360 = vperm.slane %v1234, 6
        %v1361 = vperm.slane %v1234, 7
        %v1362 = vperm.slane %v1235, 0
        %v1363 = vperm.slane %v1235, 1
        %v1364 = vperm.slane %v1235, 2
        %v1365 = vperm.slane %v1235, 3
        %v1366 = vperm.slane %v1235, 4
        %v1367 = vperm.slane %v1235, 5
        %v1368 = vperm.slane %v1235, 6
        %v1369 = vperm.slane %v1235, 7
        %v1370 = vperm.slane %v1236, 0
        %v1371 = vperm.slane %v1236, 1
        %v1372 = vperm.slane %v1236, 2
        %v1373 = vperm.slane %v1236, 3
        %v1374 = vperm.slane %v1236, 4
        %v1375 = vperm.slane %v1236, 5
        %v1376 = vperm.slane %v1236, 6
        %v1377 = vperm.slane %v1236, 7
        %v1378 = vperm.slane %v1237, 0
        %v1379 = vperm.slane %v1237, 1
        %v1380 = vperm.slane %v1237, 2
        %v1381 = vperm.slane %v1237, 3
        %v1382 = vperm.slane %v1237, 4
        %v1383 = vperm.slane %v1237, 5
        %v1384 = vperm.slane %v1237, 6
        %v1385 = vperm.slane %v1237, 7
        %1386 = vst [vmem:[#allocation1] ss:$9 sm:$0xff] %v1258
        %s1387 = scalar_lea.vmem [#allocation1], 1
        %1388 = vst [vmem:[%s1387] ss:$9 sm:$0xff] %v1259
        %s1389 = scalar_lea.vmem [#allocation1], 2
        %1390 = vst [vmem:[%s1389] ss:$9 sm:$0xff] %v1260
        %s1391 = scalar_lea.vmem [#allocation1], 3
        %1392 = vst [vmem:[%s1391] ss:$9 sm:$0xff] %v1261
        %s1393 = scalar_lea.vmem [#allocation1], 4
        %1394 = vst [vmem:[%s1393] ss:$9 sm:$0xff] %v1262
        %s1395 = scalar_lea.vmem [#allocation1], 5
        %1396 = vst [vmem:[%s1395] ss:$9 sm:$0xff] %v1263
        %s1397 = scalar_lea.vmem [#allocation1], 6
        %1398 = vst [vmem:[%s1397] ss:$9 sm:$0xff] %v1264
        %s1399 = scalar_lea.vmem [#allocation1], 7
        %1400 = vst [vmem:[%s1399] ss:$9 sm:$0xff] %v1265
        %v1401 = vld [vmem:[#allocation1] sm:$0xff]
        %1402 = vst [vmem:[#allocation1] ss:$9 sm:$0xff] %v1266
        %1403 = vst [vmem:[%s1387] ss:$9 sm:$0xff] %v1267
        %1404 = vst [vmem:[%s1389] ss:$9 sm:$0xff] %v1268
        %1405 = vst [vmem:[%s1391] ss:$9 sm:$0xff] %v1269
        %1406 = vst [vmem:[%s1393] ss:$9 sm:$0xff] %v1270
        %1407 = vst [vmem:[%s1395] ss:$9 sm:$0xff] %v1271
        %1408 = vst [vmem:[%s1397] ss:$9 sm:$0xff] %v1272
        %1409 = vst [vmem:[%s1399] ss:$9 sm:$0xff] %v1273
        %v1410 = vld [vmem:[#allocation1] sm:$0xff]
        %1411 = vst [vmem:[#allocation1] ss:$9 sm:$0xff] %v1274
        %1412 = vst [vmem:[%s1387] ss:$9 sm:$0xff] %v1275
        %1413 = vst [vmem:[%s1389] ss:$9 sm:$0xff] %v1276
        %1414 = vst [vmem:[%s1391] ss:$9 sm:$0xff] %v1277
        %1415 = vst [vmem:[%s1393] ss:$9 sm:$0xff] %v1278
        %1416 = vst [vmem:[%s1395] ss:$9 sm:$0xff] %v1279
        %1417 = vst [vmem:[%s1397] ss:$9 sm:$0xff] %v1280
        %1418 = vst [vmem:[%s1399] ss:$9 sm:$0xff] %v1281
        %v1419 = vld [vmem:[#allocation1] sm:$0xff]
        %1420 = vst [vmem:[#allocation1] ss:$9 sm:$0xff] %v1282
        %1421 = vst [vmem:[%s1387] ss:$9 sm:$0xff] %v1283
        %1422 = vst [vmem:[%s1389] ss:$9 sm:$0xff] %v1284
        %1423 = vst [vmem:[%s1391] ss:$9 sm:$0xff] %v1285
        %1424 = vst [vmem:[%s1393] ss:$9 sm:$0xff] %v1286
        %1425 = vst [vmem:[%s1395] ss:$9 sm:$0xff] %v1287
        %1426 = vst [vmem:[%s1397] ss:$9 sm:$0xff] %v1288
        %1427 = vst [vmem:[%s1399] ss:$9 sm:$0xff] %v1289
        %v1428 = vld [vmem:[#allocation1] sm:$0xff]
        %1429 = vst [vmem:[#allocation1] ss:$9 sm:$0xff] %v1290
        %1430 = vst [vmem:[%s1387] ss:$9 sm:$0xff] %v1291
        %1431 = vst [vmem:[%s1389] ss:$9 sm:$0xff] %v1292
        %1432 = vst [vmem:[%s1391] ss:$9 sm:$0xff] %v1293
        %1433 = vst [vmem:[%s1393] ss:$9 sm:$0xff] %v1294
        %1434 = vst [vmem:[%s1395] ss:$9 sm:$0xff] %v1295
        %1435 = vst [vmem:[%s1397] ss:$9 sm:$0xff] %v1296
        %1436 = vst [vmem:[%s1399] ss:$9 sm:$0xff] %v1297
        %v1437 = vld [vmem:[#allocation1] sm:$0xff]
        %1438 = vst [vmem:[#allocation1] ss:$9 sm:$0xff] %v1298
        %1439 = vst [vmem:[%s1387] ss:$9 sm:$0xff] %v1299
        %1440 = vst [vmem:[%s1389] ss:$9 sm:$0xff] %v1300
        %1441 = vst [vmem:[%s1391] ss:$9 sm:$0xff] %v1301
        %1442 = vst [vmem:[%s1393] ss:$9 sm:$0xff] %v1302
        %1443 = vst [vmem:[%s1395] ss:$9 sm:$0xff] %v1303
        %1444 = vst [vmem:[%s1397] ss:$9 sm:$0xff] %v1304
        %1445 = vst [vmem:[%s1399] ss:$9 sm:$0xff] %v1305
        %v1446 = vld [vmem:[#allocation1] sm:$0xff]
        %1447 = vst [vmem:[#allocation1] ss:$9 sm:$0xff] %v1306
        %1448 = vst [vmem:[%s1387] ss:$9 sm:$0xff] %v1307
        %1449 = vst [vmem:[%s1389] ss:$9 sm:$0xff] %v1308
        %1450 = vst [vmem:[%s1391] ss:$9 sm:$0xff] %v1309
        %1451 = vst [vmem:[%s1393] ss:$9 sm:$0xff] %v1310
        %1452 = vst [vmem:[%s1395] ss:$9 sm:$0xff] %v1311
        %1453 = vst [vmem:[%s1397] ss:$9 sm:$0xff] %v1312
        %1454 = vst [vmem:[%s1399] ss:$9 sm:$0xff] %v1313
        %v1455 = vld [vmem:[#allocation1] sm:$0xff]
        %1456 = vst [vmem:[#allocation1] ss:$9 sm:$0xff] %v1314
        %1457 = vst [vmem:[%s1387] ss:$9 sm:$0xff] %v1315
        %1458 = vst [vmem:[%s1389] ss:$9 sm:$0xff] %v1316
        %1459 = vst [vmem:[%s1391] ss:$9 sm:$0xff] %v1317
        %1460 = vst [vmem:[%s1393] ss:$9 sm:$0xff] %v1318
        %1461 = vst [vmem:[%s1395] ss:$9 sm:$0xff] %v1319
        %1462 = vst [vmem:[%s1397] ss:$9 sm:$0xff] %v1320
        %1463 = vst [vmem:[%s1399] ss:$9 sm:$0xff] %v1321
        %v1464 = vld [vmem:[#allocation1] sm:$0xff]
        %1465 = vst [vmem:[#allocation1] ss:$9 sm:$0xff] %v1322
        %1466 = vst [vmem:[%s1387] ss:$9 sm:$0xff] %v1323
        %1467 = vst [vmem:[%s1389] ss:$9 sm:$0xff] %v1324
        %1468 = vst [vmem:[%s1391] ss:$9 sm:$0xff] %v1325
        %1469 = vst [vmem:[%s1393] ss:$9 sm:$0xff] %v1326
        %1470 = vst [vmem:[%s1395] ss:$9 sm:$0xff] %v1327
        %1471 = vst [vmem:[%s1397] ss:$9 sm:$0xff] %v1328
        %1472 = vst [vmem:[%s1399] ss:$9 sm:$0xff] %v1329
        %v1473 = vld [vmem:[#allocation1] sm:$0xff]
        %1474 = vst [vmem:[#allocation1] ss:$9 sm:$0xff] %v1330
        %1475 = vst [vmem:[%s1387] ss:$9 sm:$0xff] %v1331
        %1476 = vst [vmem:[%s1389] ss:$9 sm:$0xff] %v1332
        %1477 = vst [vmem:[%s1391] ss:$9 sm:$0xff] %v1333
        %1478 = vst [vmem:[%s1393] ss:$9 sm:$0xff] %v1334
        %1479 = vst [vmem:[%s1395] ss:$9 sm:$0xff] %v1335
        %1480 = vst [vmem:[%s1397] ss:$9 sm:$0xff] %v1336
        %1481 = vst [vmem:[%s1399] ss:$9 sm:$0xff] %v1337
        %v1482 = vld [vmem:[#allocation1] sm:$0xff]
        %1483 = vst [vmem:[#allocation1] ss:$9 sm:$0xff] %v1338
        %1484 = vst [vmem:[%s1387] ss:$9 sm:$0xff] %v1339
        %1485 = vst [vmem:[%s1389] ss:$9 sm:$0xff] %v1340
        %1486 = vst [vmem:[%s1391] ss:$9 sm:$0xff] %v1341
        %1487 = vst [vmem:[%s1393] ss:$9 sm:$0xff] %v1342
        %1488 = vst [vmem:[%s1395] ss:$9 sm:$0xff] %v1343
        %1489 = vst [vmem:[%s1397] ss:$9 sm:$0xff] %v1344
        %1490 = vst [vmem:[%s1399] ss:$9 sm:$0xff] %v1345
        %v1491 = vld [vmem:[#allocation1] sm:$0xff]
        %1492 = vst [vmem:[#allocation1] ss:$9 sm:$0xff] %v1346
        %1493 = vst [vmem:[%s1387] ss:$9 sm:$0xff] %v1347
        %1494 = vst [vmem:[%s1389] ss:$9 sm:$0xff] %v1348
        %1495 = vst [vmem:[%s1391] ss:$9 sm:$0xff] %v1349
        %1496 = vst [vmem:[%s1393] ss:$9 sm:$0xff] %v1350
        %1497 = vst [vmem:[%s1395] ss:$9 sm:$0xff] %v1351
        %1498 = vst [vmem:[%s1397] ss:$9 sm:$0xff] %v1352
        %1499 = vst [vmem:[%s1399] ss:$9 sm:$0xff] %v1353
        %v1500 = vld [vmem:[#allocation1] sm:$0xff]
        %1501 = vst [vmem:[#allocation1] ss:$9 sm:$0xff] %v1354
        %1502 = vst [vmem:[%s1387] ss:$9 sm:$0xff] %v1355
        %1503 = vst [vmem:[%s1389] ss:$9 sm:$0xff] %v1356
        %1504 = vst [vmem:[%s1391] ss:$9 sm:$0xff] %v1357
        %1505 = vst [vmem:[%s1393] ss:$9 sm:$0xff] %v1358
        %1506 = vst [vmem:[%s1395] ss:$9 sm:$0xff] %v1359
        %1507 = vst [vmem:[%s1397] ss:$9 sm:$0xff] %v1360
        %1508 = vst [vmem:[%s1399] ss:$9 sm:$0xff] %v1361
        %v1509 = vld [vmem:[#allocation1] sm:$0xff]
        %1510 = vst [vmem:[#allocation1] ss:$9 sm:$0xff] %v1362
        %1511 = vst [vmem:[%s1387] ss:$9 sm:$0xff] %v1363
        %1512 = vst [vmem:[%s1389] ss:$9 sm:$0xff] %v1364
        %1513 = vst [vmem:[%s1391] ss:$9 sm:$0xff] %v1365
        %1514 = vst [vmem:[%s1393] ss:$9 sm:$0xff] %v1366
        %1515 = vst [vmem:[%s1395] ss:$9 sm:$0xff] %v1367
        %1516 = vst [vmem:[%s1397] ss:$9 sm:$0xff] %v1368
        %1517 = vst [vmem:[%s1399] ss:$9 sm:$0xff] %v1369
        %v1518 = vld [vmem:[#allocation1] sm:$0xff]
        %1519 = vst [vmem:[#allocation1] ss:$9 sm:$0xff] %v1370
        %1520 = vst [vmem:[%s1387] ss:$9 sm:$0xff] %v1371
        %1521 = vst [vmem:[%s1389] ss:$9 sm:$0xff] %v1372
        %1522 = vst [vmem:[%s1391] ss:$9 sm:$0xff] %v1373
        %1523 = vst [vmem:[%s1393] ss:$9 sm:$0xff] %v1374
        %1524 = vst [vmem:[%s1395] ss:$9 sm:$0xff] %v1375
        %1525 = vst [vmem:[%s1397] ss:$9 sm:$0xff] %v1376
        %1526 = vst [vmem:[%s1399] ss:$9 sm:$0xff] %v1377
        %v1527 = vld [vmem:[#allocation1] sm:$0xff]
        %1528 = vst [vmem:[#allocation1] ss:$9 sm:$0xff] %v1378
        %1529 = vst [vmem:[%s1387] ss:$9 sm:$0xff] %v1379
        %1530 = vst [vmem:[%s1389] ss:$9 sm:$0xff] %v1380
        %1531 = vst [vmem:[%s1391] ss:$9 sm:$0xff] %v1381
        %1532 = vst [vmem:[%s1393] ss:$9 sm:$0xff] %v1382
        %1533 = vst [vmem:[%s1395] ss:$9 sm:$0xff] %v1383
        %1534 = vst [vmem:[%s1397] ss:$9 sm:$0xff] %v1384
        %1535 = vst [vmem:[%s1399] ss:$9 sm:$0xff] %v1385
        %v1536 = vld [vmem:[#allocation1] sm:$0xff]
        %1537 = vset.pattern.permute.xlu0 0
        %1538 = vperm.xlu0 %1537, %v1401
        %v1539 = vpop.permute.xlu0 %1538
        %1540 = vset.pattern.permute.xlu0 0
        %1541 = vperm.xlu0 %1540, %v1410
        %v1542 = vpop.permute.xlu0 %1541
        %1543 = vset.pattern.permute.xlu0 0
        %1544 = vperm.xlu0 %1543, %v1419
        %v1545 = vpop.permute.xlu0 %1544
        %1546 = vset.pattern.permute.xlu0 0
        %1547 = vperm.xlu0 %1546, %v1428
        %v1548 = vpop.permute.xlu0 %1547
        %1549 = vset.pattern.permute.xlu0 0
        %1550 = vperm.xlu0 %1549, %v1437
        %v1551 = vpop.permute.xlu0 %1550
        %1552 = vset.pattern.permute.xlu0 0
        %1553 = vperm.xlu0 %1552, %v1446
        %v1554 = vpop.permute.xlu0 %1553
        %1555 = vset.pattern.permute.xlu0 0
        %1556 = vperm.xlu0 %1555, %v1455
        %v1557 = vpop.permute.xlu0 %1556
        %1558 = vset.pattern.permute.xlu0 0
        %1559 = vperm.xlu0 %1558, %v1464
        %v1560 = vpop.permute.xlu0 %1559
        %1561 = vset.pattern.permute.xlu0 0
        %1562 = vperm.xlu0 %1561, %v1473
        %v1563 = vpop.permute.xlu0 %1562
        %1564 = vset.pattern.permute.xlu0 0
        %1565 = vperm.xlu0 %1564, %v1482
        %v1566 = vpop.permute.xlu0 %1565
        %1567 = vset.pattern.permute.xlu0 0
        %1568 = vperm.xlu0 %1567, %v1491
        %v1569 = vpop.permute.xlu0 %1568
        %1570 = vset.pattern.permute.xlu0 0
        %1571 = vperm.xlu0 %1570, %v1500
        %v1572 = vpop.permute.xlu0 %1571
        %1573 = vset.pattern.permute.xlu0 0
        %1574 = vperm.xlu0 %1573, %v1509
        %v1575 = vpop.permute.xlu0 %1574
        %1576 = vset.pattern.permute.xlu0 0
        %1577 = vperm.xlu0 %1576, %v1518
        %v1578 = vpop.permute.xlu0 %1577
        %1579 = vset.pattern.permute.xlu0 0
        %1580 = vperm.xlu0 %1579, %v1527
        %v1581 = vpop.permute.xlu0 %1580
        %1582 = vset.pattern.permute.xlu0 0
        %1583 = vperm.xlu0 %1582, %v1536
        %v1584 = vpop.permute.xlu0 %1583
        %v1585 = vlaneseq
        %v1586 = vand.u32 %v1585, 127
        %v1587 = vperm.slane %v1539, %v1586
        %v1588 = vadd.s32 %v1586, 4294967288
        %v1589 = vperm.slane %v1542, %v1588
        %vm1590 = vcmask 130112
        %v1591 = vsel %vm1590, %v1589, %v1587
        %v1592 = vadd.s32 %v1586, 4294967280
        %v1593 = vperm.slane %v1545, %v1592
        %vm1594 = vcmask 195712
        %v1595 = vsel %vm1594, %v1593, %v1591
        %v1596 = vadd.s32 %v1586, 4294967272
        %v1597 = vperm.slane %v1548, %v1596
        %vm1598 = vcmask 261312
        %v1599 = vsel %vm1598, %v1597, %v1595
        %v1600 = vadd.s32 %v1586, 4294967264
        %v1601 = vperm.slane %v1551, %v1600
        %vm1602 = vcmask 326912
        %v1603 = vsel %vm1602, %v1601, %v1599
        %v1604 = vadd.s32 %v1586, 4294967256
        %v1605 = vperm.slane %v1554, %v1604
        %vm1606 = vcmask 392512
        %v1607 = vsel %vm1606, %v1605, %v1603
        %v1608 = vadd.s32 %v1586, 4294967248
        %v1609 = vperm.slane %v1557, %v1608
        %vm1610 = vcmask 458112
        %v1611 = vsel %vm1610, %v1609, %v1607
        %v1612 = vadd.s32 %v1586, 4294967240
        %v1613 = vperm.slane %v1560, %v1612
        %vm1614 = vcmask 523712
        %v1615 = vsel %vm1614, %v1613, %v1611
        %v1616 = vadd.s32 %v1586, 4294967232
        %v1617 = vperm.slane %v1563, %v1616
        %vm1618 = vcmask 589312
        %v1619 = vsel %vm1618, %v1617, %v1615
        %v1620 = vadd.s32 %v1586, 4294967224
        %v1621 = vperm.slane %v1566, %v1620
        %vm1622 = vcmask 654912
        %v1623 = vsel %vm1622, %v1621, %v1619
        %v1624 = vadd.s32 %v1586, 4294967216
        %v1625 = vperm.slane %v1569, %v1624
        %vm1626 = vcmask 720512
        %v1627 = vsel %vm1626, %v1625, %v1623
        %v1628 = vadd.s32 %v1586, 4294967208
        %v1629 = vperm.slane %v1572, %v1628
        %vm1630 = vcmask 786112
        %v1631 = vsel %vm1630, %v1629, %v1627
        %v1632 = vadd.s32 %v1586, 4294967200
        %v1633 = vperm.slane %v1575, %v1632
        %vm1634 = vcmask 851712
        %v1635 = vsel %vm1634, %v1633, %v1631
        %v1636 = vadd.s32 %v1586, 4294967192
        %v1637 = vperm.slane %v1578, %v1636
        %vm1638 = vcmask 917312
        %v1639 = vsel %vm1638, %v1637, %v1635
        %v1640 = vadd.s32 %v1586, 4294967184
        %v1641 = vperm.slane %v1581, %v1640
        %vm1642 = vcmask 982912
        %v1643 = vsel %vm1642, %v1641, %v1639
        %v1644 = vadd.s32 %v1586, 4294967176
        %v1645 = vperm.slane %v1584, %v1644
        %vm1646 = vcmask 1048512
        %v1647 = vsel %vm1646, %v1645, %v1643
        %v1649 = vsel %vm1241, %v1647, 0.0
        %1650 = vst [vmem:[%s391] sm:$0x1] %v1649
        %s1651 = sand.u32 %s275, 1
        %s1652 = scalar_lea.sflag [#allocation4], %s1651
        %s1653 = sand.u32 %s275, 1
        %s1654 = scalar_lea.vmem [#allocation3], %s1653
        // Predicated region
        $region65: #{dcn_md_forward.1} parent=63 // pred_check
          %p1655 = pneg %p285
        $region66: #{dcn_md_forward.1} parent=63 // pred_check_branch
          %1657 = sbr.rel (%p1655) target = $region68
        $region67: #{dcn_md_forward.1} parent=63 // pred_region
          %1659 = vsyncadd %s1652, 0
          %s1660 = scalar_lea.hbm %s11, %s26
          %s1662 = sshll.u32 %s1654, 4
          %s1663 = int_to_ptr.vmem [resolvable:$true] %s1662
          %s1664 = sshll.u32 %s1660, 4
          %s1665 = int_to_ptr.hbm [resolvable:$true] %s1664
          %1667 = dma.vmem_to_hbm [thread:$0]  %s1663, 16, %s1665, %s1652
        $region68: #{dcn_md_forward.1} parent=63 // pred_fallthru
          _
      $region64: #{dcn_md_forward.1} parent=5 // pred_fallthru
        _
      %p1668 = scmp.le.s32.totalorder 2, %s21
      // Predicated region
      $region69: #{dcn_md_forward.1} parent=5 // pred_check
        %p1669 = pneg %p1668
      $region70: #{dcn_md_forward.1} parent=5 // pred_check_branch
        %1671 = sbr.rel (%p1669) target = $region72
      $region71: #{dcn_md_forward.1} parent=5 // pred_region
        %s1672 = ssub.s32 %s21, 2
        // Predicated region
        $region73: #{dcn_md_forward.1} parent=71 // pred_check
          %p1673 = pneg %p291
        $region74: #{dcn_md_forward.1} parent=71 // pred_check_branch
          %1675 = sbr.rel (%p1673) target = $region76
        $region75: #{dcn_md_forward.1} parent=71 // pred_region
          %s1676 = sand.u32 %s276, 1
          %s1677 = scalar_lea.sflag [#allocation4], %s1676
          %s1678 = sand.u32 %s276, 1
          %s1679 = scalar_lea.vmem [#allocation3], %s1678
          %1681 = dma.done %s1677, 16
        $region76: #{dcn_md_forward.1} parent=71 // pred_fallthru
          _
      $region72: #{dcn_md_forward.1} parent=5 // pred_fallthru
        _
    $region6: #{dcn_md_forward.1} parent=1 // loop_footer
      %s25 = sadd.s32 1, %s21
    $region7: #{dcn_md_forward.1} parent=1 // loop_footer_branch
      %20 = sbr.rel target = $region3
    $region8: #{dcn_md_forward.1} parent=1 // loop_exit
      _
    %1682 = vsyncpa [#allocation4], 1
    %s1683 = scalar_lea.sflag [#allocation4], 1
    %1684 = vsyncpa %s1683, 1

</llo_original>
